<compile_context>
chip_gen: v7x
topology: tpu7x:2x2x1
jax: 0.10.0
libtpu: 0.0.40
codegen_flags: <defaults>
</compile_context>

<pallas_src>
import functools

import jax
import jax.numpy as jnp
from jax import lax
from jax.experimental import pallas as pl
from jax.experimental.pallas import tpu as pltpu


# ----------------------------------------------------------------------------
# Pallas kernel: one (batch, row-block) tile of a stride-2 4x4 conv expressed
# as 4 shifted GEMMs over the space-to-depth'd input, + bias + ReLU.
# ----------------------------------------------------------------------------
def _s2d_conv_kernel(a_ref, w_ref, b_ref, o_ref, *, wo1, r_out):
    # a_ref : (1, 1, (th+2)*wo1, K)   flattened (h2, w2) rows of s2d input
    # w_ref : (2, 2, K, Cout_pad)     per-tap (ai, aj) weight matrices
    # b_ref : (1, Cout_pad)           bias (lane-padded)
    # o_ref : (1, 1, th*wo1, Cout_pad)
    cpad = o_ref.shape[-1]
    acc = jnp.zeros((r_out, cpad), jnp.float32)
    for ai in range(2):            # static 2x2 tap loop, unrolled at trace time
        for aj in range(2):
            ofs = ai * wo1 + aj    # shifted view of the flattened (h2, w2) rows
            a_tap = a_ref[0, 0, pl.ds(ofs, r_out), :]
            acc += jnp.dot(a_tap, w_ref[ai, aj],
                           preferred_element_type=jnp.float32)
    o_ref[0, 0, :, :] = jnp.maximum(acc + b_ref[...], 0.0).astype(o_ref.dtype)


# ----------------------------------------------------------------------------
# Helpers
# ----------------------------------------------------------------------------
def _round_up(x, m):
    return (x + m - 1) // m * m


def _pick_row_block(ho, wo1, k, cout_pad, budget_bytes=6 * 1024 * 1024):
    """Output-row tile height so double-buffered in+out f32 tiles fit `budget_bytes`.

    6 MiB keeps the pipeline well inside v5e's 16 MiB default scoped VMEM and
    v7x's 64 MiB physical VMEM (feedback: bound VMEM, keep double-buffering)."""
    per_row = 2 * 4 * wo1 * (k + cout_pad)   # dbl-buffered f32 bytes per output row
    th = budget_bytes // max(per_row, 1)
    return int(max(1, min(ho, th)))


# ----------------------------------------------------------------------------
# One conv layer: relu(conv2d(x, w, b)), kernel 4x4, stride 2, padding 1.
# Input / output are NHWC (feedback: no NCHW round-trip between the convs).
# ----------------------------------------------------------------------------
def _conv4x4_s2_p1_relu_nhwc(x, w_oihw, bias, *, use_bf16=False):
    N, H, W, Cin = x.shape
    Cout = w_oihw.shape[0]
    assert w_oihw.shape == (Cout, Cin, 4, 4)
    assert H % 2 == 0 and W % 2 == 0, "even spatial dims required (k=4, s=2, p=1)"
    Ho, Wo = H // 2, W // 2
    Wo1 = Wo + 1
    K = 4 * Cin                              # contraction size per tap
    Cout_pad = _round_up(Cout, 128)          # lane-dense output -> unmasked vst

    # --- weights: (Cout, Cin, 4, 4) -> (ai, aj, [pi, pj, Cin] = K, Cout_pad) ---
    # kernel index k = 2*a + p  (a = coarse tap, p = parity phase)
    w6 = w_oihw.reshape(Cout, Cin, 2, 2, 2, 2)          # (co, c, ai, pi, aj, pj)
    w6 = jnp.transpose(w6, (2, 4, 3, 5, 1, 0))          # (ai, aj, pi, pj, c, co)
    w_mat = w6.reshape(2, 2, K, Cout)
    w_mat = jnp.pad(w_mat, ((0, 0), (0, 0), (0, 0), (0, Cout_pad - Cout)))
    b_pad = jnp.pad(bias, (0, Cout_pad - Cout)).reshape(1, Cout_pad)

    # --- input: zero-pad(1) + 2x2 space-to-depth -> (N, Ho+1, Wo+1, 4*Cin) ---
    # X[h2, w2, (pi, pj, c)] = x_pad[2*h2 + pi, 2*w2 + pj, c]; pure relayout.
    xp = jnp.pad(x, ((0, 0), (1, 1), (1, 1), (0, 0)))
    xs = xp.reshape(N, Ho + 1, 2, Wo1, 2, Cin)
    xs = jnp.transpose(xs, (0, 1, 3, 2, 4, 5)).reshape(N, Ho + 1, Wo1, K)

    # --- halo'd output-row blocks (th rows + 2 halo rows), flattened to 2D ---
    th = _pick_row_block(Ho, Wo1, K, Cout_pad)
    nblk = -(-Ho // th)
    ho_pad = nblk * th
    xs = jnp.pad(xs, ((0, 0), (0, ho_pad + 2 - (Ho + 1)), (0, 0), (0, 0)))
    xb = jnp.stack([xs[:, b * th: b * th + th + 2] for b in range(nblk)], axis=1)
    r_in = (th + 2) * Wo1                    # rows fed to the kernel per block
    r_out = th * Wo1                         # rows produced per block (w2=Wo col is junk)
    xb = xb.reshape(N, nblk, r_in, K)

    if use_bf16:
        # bf16 operands, f32 accumulation: native MXU rate on v6e/v7x.
        xb = xb.astype(jnp.bfloat16)
        w_mat = w_mat.astype(jnp.bfloat16)

    kernel = functools.partial(_s2d_conv_kernel, wo1=Wo1, r_out=r_out)
    flops = 2 * N * nblk * 4 * r_out * K * Cout_pad
    bytes_accessed = 4 * (N * nblk * (r_in * K + r_out * Cout_pad)
                          + 4 * K * Cout_pad + Cout_pad)

    out = pl.pallas_call(
        kernel,
        out_shape=jax.ShapeDtypeStruct((N, nblk, r_out, Cout_pad), jnp.float32),
        grid_spec=pltpu.PrefetchScalarGridSpec(
            num_scalar_prefetch=0,
            grid=(N, nblk),
            in_specs=[
                pl.BlockSpec((1, 1, r_in, K), lambda n, b: (n, b, 0, 0)),
                pl.BlockSpec((2, 2, K, Cout_pad), lambda n, b: (0, 0, 0, 0)),
                pl.BlockSpec((1, Cout_pad), lambda n, b: (0, 0)),
            ],
            out_specs=pl.BlockSpec((1, 1, r_out, Cout_pad),
                                   lambda n, b: (n, b, 0, 0)),
        ),
        compiler_params=pltpu.CompilerParams(
            dimension_semantics=("parallel", "parallel"),
            vmem_limit_bytes=32 * 1024 * 1024,
        ),
        cost_estimate=pl.CostEstimate(
            flops=int(flops), transcendentals=0,
            bytes_accessed=int(bytes_accessed)),
    )(xb, w_mat, b_pad)

    # strip the junk w2 column, lane padding and row padding; return NHWC.
    out = out.reshape(N, nblk, th, Wo1, Cout_pad)[:, :, :, :Wo, :Cout]
    out = out.reshape(N, ho_pad, Wo, Cout)[:, :Ho]
    return out


# ----------------------------------------------------------------------------
# RendererEncoder forward
# ----------------------------------------------------------------------------
def renderer_encoder(x_nchw, w1, b1, w2, b2, *, use_bf16=False):
    """x: (N, im_channels, H, W) NCHW float32 -> (N, h_dim, H/4, W/4) NCHW."""
    x = jnp.transpose(x_nchw, (0, 2, 3, 1))                      # NCHW -> NHWC, once
    h = _conv4x4_s2_p1_relu_nhwc(x, w1, b1, use_bf16=use_bf16)   # (N, H/2, W/2, 2*h_dim)
    y = _conv4x4_s2_p1_relu_nhwc(h, w2, b2, use_bf16=use_bf16)   # (N, H/4, W/4, h_dim)
    # TODO(synk): fuse conv1+conv2 into one pallas_call per spatial tile (hidden
    # window resident in VMEM scratch) so the hidden tensor never hits HBM.
    return jnp.transpose(y, (0, 3, 1, 2))                        # NHWC -> NCHW, once


# ----------------------------------------------------------------------------
# Pure-JAX reference (for correctness check)
# ----------------------------------------------------------------------------
def _reference(x, w1, b1, w2, b2):
    def conv(x, w, b):
        y = lax.conv_general_dilated(
            x, w, window_strides=(2, 2), padding=((1, 1), (1, 1)),
            dimension_numbers=("NCHW", "OIHW", "NCHW"))
        return jnp.maximum(y + b[None, :, None, None], 0.0)
    return conv(conv(x, w1, b1), w2, b2)


if __name__ == "__main__":
    key = jax.random.PRNGKey(0)
    N, C, H, W = 2, 4, 16, 16
    h_dim = 32

    k1, k2, k3, k4, k5 = jax.random.split(key, 5)
    x = jax.random.normal(k1, (N, C, H, W), jnp.float32)
    w1 = jax.random.normal(k2, (2 * h_dim, C, 4, 4), jnp.float32) * 0.05
    b1 = jax.random.normal(k3, (2 * h_dim,), jnp.float32) * 0.05
    w2 = jax.random.normal(k4, (h_dim, 2 * h_dim, 4, 4), jnp.float32) * 0.05
    b2 = jax.random.normal(k5, (h_dim,), jnp.float32) * 0.05

    fwd = jax.jit(renderer_encoder, static_argnames=("use_bf16",))
    out = jax.block_until_ready(fwd(x, w1, b1, w2, b2))
    assert out.shape == (N, h_dim, H // 4, W // 4), out.shape

    ref = _reference(x, w1, b1, w2, b2)
    assert bool(jnp.allclose(out, ref, atol=1e-4, rtol=1e-4)), "mismatch vs reference"

    print("KERNEL_OK")
</pallas_src>

<mosaic_0001>
module attributes {stable_mosaic.version = 11 : i64} {
  func.func @_s2d_conv_kernel(%arg0: i32, %arg1: i32, %arg2: memref<1x1x90x16xf32, #tpu.memory_space<vmem>>, %arg3: memref<2x2x16x128xf32, #tpu.memory_space<vmem>>, %arg4: memref<1x128xf32, #tpu.memory_space<vmem>>, %arg5: memref<1x1x72x128xf32, #tpu.memory_space<vmem>>) attributes {dimension_semantics = [#tpu.dimension_semantics<parallel>, #tpu.dimension_semantics<parallel>], iteration_bounds = array<i64: 2, 1>, scalar_prefetch = 0 : i64, scratch_operands = 0 : i64, tpu.core_type = #tpu.core_type<tc>, window_params = [{transform_indices = @transform_0, window_bounds = array<i64: 1, 1, 90, 16>}, {pipeline_mode = #tpu.pipeline_mode<synchronous>, transform_indices = @transform_1, window_bounds = array<i64: 2, 2, 16, 128>}, {pipeline_mode = #tpu.pipeline_mode<synchronous>, transform_indices = @transform_2, window_bounds = array<i64: 1, 128>}, {transform_indices = @transform_3, window_bounds = array<i64: 1, 1, 72, 128>}]} {
    %cst = arith.constant 0.000000e+00 : f32
    %0 = vector.broadcast %cst : f32 to vector<72x128xf32>
    %c0 = arith.constant 0 : index
    %c0_0 = arith.constant 0 : index
    %c0_1 = arith.constant 0 : index
    %c0_2 = arith.constant 0 : index
    %1 = vector.load %arg2[%c0, %c0_0, %c0_1, %c0_2] : memref<1x1x90x16xf32, #tpu.memory_space<vmem>>, vector<1x1x72x16xf32>
    %2 = vector.shape_cast %1 : vector<1x1x72x16xf32> to vector<72x16xf32>
    %c0_3 = arith.constant 0 : index
    %c0_4 = arith.constant 0 : index
    %c0_5 = arith.constant 0 : index
    %c0_6 = arith.constant 0 : index
    %3 = vector.load %arg3[%c0_3, %c0_4, %c0_5, %c0_6] : memref<2x2x16x128xf32, #tpu.memory_space<vmem>>, vector<1x1x16x128xf32>
    %4 = vector.shape_cast %3 : vector<1x1x16x128xf32> to vector<16x128xf32>
    %cst_7 = arith.constant dense<0.000000e+00> : vector<72x128xf32>
    %5 = tpu.matmul %2, %4, %cst_7 {dimension_numbers = #tpu.dot_dimension_numbers<[1], [0], [0], [1], [0, 0, 1, 1], [], []>} : vector<72x16xf32>, vector<16x128xf32>, vector<72x128xf32> -> vector<72x128xf32>
    %6 = arith.addf %0, %5 : vector<72x128xf32>
    %c0_8 = arith.constant 0 : index
    %c0_9 = arith.constant 0 : index
    %c1 = arith.constant 1 : index
    %c0_10 = arith.constant 0 : index
    %7 = vector.load %arg2[%c0_8, %c0_9, %c1, %c0_10] : memref<1x1x90x16xf32, #tpu.memory_space<vmem>>, vector<1x1x72x16xf32>
    %8 = vector.shape_cast %7 : vector<1x1x72x16xf32> to vector<72x16xf32>
    %c0_11 = arith.constant 0 : index
    %c1_12 = arith.constant 1 : index
    %c0_13 = arith.constant 0 : index
    %c0_14 = arith.constant 0 : index
    %9 = vector.load %arg3[%c0_11, %c1_12, %c0_13, %c0_14] : memref<2x2x16x128xf32, #tpu.memory_space<vmem>>, vector<1x1x16x128xf32>
    %10 = vector.shape_cast %9 : vector<1x1x16x128xf32> to vector<16x128xf32>
    %cst_15 = arith.constant dense<0.000000e+00> : vector<72x128xf32>
    %11 = tpu.matmul %8, %10, %cst_15 {dimension_numbers = #tpu.dot_dimension_numbers<[1], [0], [0], [1], [0, 0, 1, 1], [], []>} : vector<72x16xf32>, vector<16x128xf32>, vector<72x128xf32> -> vector<72x128xf32>
    %12 = arith.addf %6, %11 : vector<72x128xf32>
    %c0_16 = arith.constant 0 : index
    %c0_17 = arith.constant 0 : index
    %c9 = arith.constant 9 : index
    %c0_18 = arith.constant 0 : index
    %13 = vector.load %arg2[%c0_16, %c0_17, %c9, %c0_18] : memref<1x1x90x16xf32, #tpu.memory_space<vmem>>, vector<1x1x72x16xf32>
    %14 = vector.shape_cast %13 : vector<1x1x72x16xf32> to vector<72x16xf32>
    %c1_19 = arith.constant 1 : index
    %c0_20 = arith.constant 0 : index
    %c0_21 = arith.constant 0 : index
    %c0_22 = arith.constant 0 : index
    %15 = vector.load %arg3[%c1_19, %c0_20, %c0_21, %c0_22] : memref<2x2x16x128xf32, #tpu.memory_space<vmem>>, vector<1x1x16x128xf32>
    %16 = vector.shape_cast %15 : vector<1x1x16x128xf32> to vector<16x128xf32>
    %cst_23 = arith.constant dense<0.000000e+00> : vector<72x128xf32>
    %17 = tpu.matmul %14, %16, %cst_23 {dimension_numbers = #tpu.dot_dimension_numbers<[1], [0], [0], [1], [0, 0, 1, 1], [], []>} : vector<72x16xf32>, vector<16x128xf32>, vector<72x128xf32> -> vector<72x128xf32>
    %18 = arith.addf %12, %17 : vector<72x128xf32>
    %c0_24 = arith.constant 0 : index
    %c0_25 = arith.constant 0 : index
    %c10 = arith.constant 10 : index
    %c0_26 = arith.constant 0 : index
    %19 = vector.load %arg2[%c0_24, %c0_25, %c10, %c0_26] : memref<1x1x90x16xf32, #tpu.memory_space<vmem>>, vector<1x1x72x16xf32>
    %20 = vector.shape_cast %19 : vector<1x1x72x16xf32> to vector<72x16xf32>
    %c1_27 = arith.constant 1 : index
    %c1_28 = arith.constant 1 : index
    %c0_29 = arith.constant 0 : index
    %c0_30 = arith.constant 0 : index
    %21 = vector.load %arg3[%c1_27, %c1_28, %c0_29, %c0_30] : memref<2x2x16x128xf32, #tpu.memory_space<vmem>>, vector<1x1x16x128xf32>
    %22 = vector.shape_cast %21 : vector<1x1x16x128xf32> to vector<16x128xf32>
    %cst_31 = arith.constant dense<0.000000e+00> : vector<72x128xf32>
    %23 = tpu.matmul %20, %22, %cst_31 {dimension_numbers = #tpu.dot_dimension_numbers<[1], [0], [0], [1], [0, 0, 1, 1], [], []>} : vector<72x16xf32>, vector<16x128xf32>, vector<72x128xf32> -> vector<72x128xf32>
    %24 = arith.addf %18, %23 : vector<72x128xf32>
    %c0_32 = arith.constant 0 : index
    %c0_33 = arith.constant 0 : index
    %25 = vector.load %arg4[%c0_32, %c0_33] : memref<1x128xf32, #tpu.memory_space<vmem>>, vector<1x128xf32>
    %26 = vector.broadcast %25 : vector<1x128xf32> to vector<72x128xf32>
    %27 = arith.addf %24, %26 : vector<72x128xf32>
    %cst_34 = arith.constant 0.000000e+00 : f32
    %28 = vector.broadcast %cst_34 : f32 to vector<72x128xf32>
    %29 = arith.maximumf %27, %28 : vector<72x128xf32>
    %c0_35 = arith.constant 0 : index
    %c0_36 = arith.constant 0 : index
    %c0_37 = arith.constant 0 : index
    %c0_38 = arith.constant 0 : index
    %30 = vector.load %arg5[%c0_35, %c0_36, %c0_37, %c0_38] : memref<1x1x72x128xf32, #tpu.memory_space<vmem>>, vector<1x1x72x128xf32>
    %31 = vector.shape_cast %30 : vector<1x1x72x128xf32> to vector<72x128xf32>
    %32 = vector.shape_cast %29 : vector<72x128xf32> to vector<1x1x72x128xf32>
    tpu.vector_store %arg5[%c0_35, %c0_36, %c0_37, %c0_38], %32 {strides = array<i32>} : memref<1x1x72x128xf32, #tpu.memory_space<vmem>>, vector<1x1x72x128xf32>,
    return
  }
  func.func @transform_0(%arg0: i32, %arg1: i32) -> (i32, i32, i32, i32) {
    %c0_i32 = arith.constant 0 : i32
    %c0_i32_0 = arith.constant 0 : i32
    %c0_i32_1 = arith.constant 0 : i32
    return %arg0, %arg1, %c0_i32, %c0_i32_0 : i32, i32, i32, i32
  }
  func.func @transform_1(%arg0: i32, %arg1: i32) -> (i32, i32, i32, i32) {
    %c0_i32 = arith.constant 0 : i32
    %c0_i32_0 = arith.constant 0 : i32
    %c0_i32_1 = arith.constant 0 : i32
    %c0_i32_2 = arith.constant 0 : i32
    %c0_i32_3 = arith.constant 0 : i32
    return %c0_i32, %c0_i32_0, %c0_i32_1, %c0_i32_2 : i32, i32, i32, i32
  }
  func.func @transform_2(%arg0: i32, %arg1: i32) -> (i32, i32) {
    %c0_i32 = arith.constant 0 : i32
    %c0_i32_0 = arith.constant 0 : i32
    %c0_i32_1 = arith.constant 0 : i32
    return %c0_i32, %c0_i32_0 : i32, i32
  }
  func.func @transform_3(%arg0: i32, %arg1: i32) -> (i32, i32, i32, i32) {
    %c0_i32 = arith.constant 0 : i32
    %c0_i32_0 = arith.constant 0 : i32
    %c0_i32_1 = arith.constant 0 : i32
    return %arg0, %arg1, %c0_i32, %c0_i32_0 : i32, i32, i32, i32
  }
}

module attributes {stable_mosaic.version = 11 : i64} {
  func.func @_s2d_conv_kernel(%arg0: i32, %arg1: i32, %arg2: memref<1x1x30x256xf32, #tpu.memory_space<vmem>>, %arg3: memref<2x2x256x128xf32, #tpu.memory_space<vmem>>, %arg4: memref<1x128xf32, #tpu.memory_space<vmem>>, %arg5: memref<1x1x20x128xf32, #tpu.memory_space<vmem>>) attributes {dimension_semantics = [#tpu.dimension_semantics<parallel>, #tpu.dimension_semantics<parallel>], iteration_bounds = array<i64: 2, 1>, scalar_prefetch = 0 : i64, scratch_operands = 0 : i64, tpu.core_type = #tpu.core_type<tc>, window_params = [{transform_indices = @transform_0, window_bounds = array<i64: 1, 1, 30, 256>}, {pipeline_mode = #tpu.pipeline_mode<synchronous>, transform_indices = @transform_1, window_bounds = array<i64: 2, 2, 256, 128>}, {pipeline_mode = #tpu.pipeline_mode<synchronous>, transform_indices = @transform_2, window_bounds = array<i64: 1, 128>}, {transform_indices = @transform_3, window_bounds = array<i64: 1, 1, 20, 128>}]} {
    %cst = arith.constant 0.000000e+00 : f32
    %0 = vector.broadcast %cst : f32 to vector<20x128xf32>
    %c0 = arith.constant 0 : index
    %c0_0 = arith.constant 0 : index
    %c0_1 = arith.constant 0 : index
    %c0_2 = arith.constant 0 : index
    %1 = vector.load %arg2[%c0, %c0_0, %c0_1, %c0_2] : memref<1x1x30x256xf32, #tpu.memory_space<vmem>>, vector<1x1x20x256xf32>
    %2 = vector.shape_cast %1 : vector<1x1x20x256xf32> to vector<20x256xf32>
    %c0_3 = arith.constant 0 : index
    %c0_4 = arith.constant 0 : index
    %c0_5 = arith.constant 0 : index
    %c0_6 = arith.constant 0 : index
    %3 = vector.load %arg3[%c0_3, %c0_4, %c0_5, %c0_6] : memref<2x2x256x128xf32, #tpu.memory_space<vmem>>, vector<1x1x256x128xf32>
    %4 = vector.shape_cast %3 : vector<1x1x256x128xf32> to vector<256x128xf32>
    %cst_7 = arith.constant dense<0.000000e+00> : vector<20x128xf32>
    %5 = tpu.matmul %2, %4, %cst_7 {dimension_numbers = #tpu.dot_dimension_numbers<[1], [0], [0], [1], [0, 0, 1, 1], [], []>} : vector<20x256xf32>, vector<256x128xf32>, vector<20x128xf32> -> vector<20x128xf32>
    %6 = arith.addf %0, %5 : vector<20x128xf32>
    %c0_8 = arith.constant 0 : index
    %c0_9 = arith.constant 0 : index
    %c1 = arith.constant 1 : index
    %c0_10 = arith.constant 0 : index
    %7 = vector.load %arg2[%c0_8, %c0_9, %c1, %c0_10] : memref<1x1x30x256xf32, #tpu.memory_space<vmem>>, vector<1x1x20x256xf32>
    %8 = vector.shape_cast %7 : vector<1x1x20x256xf32> to vector<20x256xf32>
    %c0_11 = arith.constant 0 : index
    %c1_12 = arith.constant 1 : index
    %c0_13 = arith.constant 0 : index
    %c0_14 = arith.constant 0 : index
    %9 = vector.load %arg3[%c0_11, %c1_12, %c0_13, %c0_14] : memref<2x2x256x128xf32, #tpu.memory_space<vmem>>, vector<1x1x256x128xf32>
    %10 = vector.shape_cast %9 : vector<1x1x256x128xf32> to vector<256x128xf32>
    %cst_15 = arith.constant dense<0.000000e+00> : vector<20x128xf32>
    %11 = tpu.matmul %8, %10, %cst_15 {dimension_numbers = #tpu.dot_dimension_numbers<[1], [0], [0], [1], [0, 0, 1, 1], [], []>} : vector<20x256xf32>, vector<256x128xf32>, vector<20x128xf32> -> vector<20x128xf32>
    %12 = arith.addf %6, %11 : vector<20x128xf32>
    %c0_16 = arith.constant 0 : index
    %c0_17 = arith.constant 0 : index
    %c5 = arith.constant 5 : index
    %c0_18 = arith.constant 0 : index
    %13 = vector.load %arg2[%c0_16, %c0_17, %c5, %c0_18] : memref<1x1x30x256xf32, #tpu.memory_space<vmem>>, vector<1x1x20x256xf32>
    %14 = vector.shape_cast %13 : vector<1x1x20x256xf32> to vector<20x256xf32>
    %c1_19 = arith.constant 1 : index
    %c0_20 = arith.constant 0 : index
    %c0_21 = arith.constant 0 : index
    %c0_22 = arith.constant 0 : index
    %15 = vector.load %arg3[%c1_19, %c0_20, %c0_21, %c0_22] : memref<2x2x256x128xf32, #tpu.memory_space<vmem>>, vector<1x1x256x128xf32>
    %16 = vector.shape_cast %15 : vector<1x1x256x128xf32> to vector<256x128xf32>
    %cst_23 = arith.constant dense<0.000000e+00> : vector<20x128xf32>
    %17 = tpu.matmul %14, %16, %cst_23 {dimension_numbers = #tpu.dot_dimension_numbers<[1], [0], [0], [1], [0, 0, 1, 1], [], []>} : vector<20x256xf32>, vector<256x128xf32>, vector<20x128xf32> -> vector<20x128xf32>
    %18 = arith.addf %12, %17 : vector<20x128xf32>
    %c0_24 = arith.constant 0 : index
    %c0_25 = arith.constant 0 : index
    %c6 = arith.constant 6 : index
    %c0_26 = arith.constant 0 : index
    %19 = vector.load %arg2[%c0_24, %c0_25, %c6, %c0_26] : memref<1x1x30x256xf32, #tpu.memory_space<vmem>>, vector<1x1x20x256xf32>
    %20 = vector.shape_cast %19 : vector<1x1x20x256xf32> to vector<20x256xf32>
    %c1_27 = arith.constant 1 : index
    %c1_28 = arith.constant 1 : index
    %c0_29 = arith.constant 0 : index
    %c0_30 = arith.constant 0 : index
    %21 = vector.load %arg3[%c1_27, %c1_28, %c0_29, %c0_30] : memref<2x2x256x128xf32, #tpu.memory_space<vmem>>, vector<1x1x256x128xf32>
    %22 = vector.shape_cast %21 : vector<1x1x256x128xf32> to vector<256x128xf32>
    %cst_31 = arith.constant dense<0.000000e+00> : vector<20x128xf32>
    %23 = tpu.matmul %20, %22, %cst_31 {dimension_numbers = #tpu.dot_dimension_numbers<[1], [0], [0], [1], [0, 0, 1, 1], [], []>} : vector<20x256xf32>, vector<256x128xf32>, vector<20x128xf32> -> vector<20x128xf32>
    %24 = arith.addf %18, %23 : vector<20x128xf32>
    %c0_32 = arith.constant 0 : index
    %c0_33 = arith.constant 0 : index
    %25 = vector.load %arg4[%c0_32, %c0_33] : memref<1x128xf32, #tpu.memory_space<vmem>>, vector<1x128xf32>
    %26 = vector.broadcast %25 : vector<1x128xf32> to vector<20x128xf32>
    %27 = arith.addf %24, %26 : vector<20x128xf32>
    %cst_34 = arith.constant 0.000000e+00 : f32
    %28 = vector.broadcast %cst_34 : f32 to vector<20x128xf32>
    %29 = arith.maximumf %27, %28 : vector<20x128xf32>
    %c0_35 = arith.constant 0 : index
    %c0_36 = arith.constant 0 : index
    %c0_37 = arith.constant 0 : index
    %c0_38 = arith.constant 0 : index
    %30 = vector.load %arg5[%c0_35, %c0_36, %c0_37, %c0_38] : memref<1x1x20x128xf32, #tpu.memory_space<vmem>>, vector<1x1x20x128xf32>
    %31 = vector.shape_cast %30 : vector<1x1x20x128xf32> to vector<20x128xf32>
    %32 = vector.shape_cast %29 : vector<20x128xf32> to vector<1x1x20x128xf32>
    tpu.vector_store %arg5[%c0_35, %c0_36, %c0_37, %c0_38], %32 {strides = array<i32>} : memref<1x1x20x128xf32, #tpu.memory_space<vmem>>, vector<1x1x20x128xf32>,
    return
  }
  func.func @transform_0(%arg0: i32, %arg1: i32) -> (i32, i32, i32, i32) {
    %c0_i32 = arith.constant 0 : i32
    %c0_i32_0 = arith.constant 0 : i32
    %c0_i32_1 = arith.constant 0 : i32
    return %arg0, %arg1, %c0_i32, %c0_i32_0 : i32, i32, i32, i32
  }
  func.func @transform_1(%arg0: i32, %arg1: i32) -> (i32, i32, i32, i32) {
    %c0_i32 = arith.constant 0 : i32
    %c0_i32_0 = arith.constant 0 : i32
    %c0_i32_1 = arith.constant 0 : i32
    %c0_i32_2 = arith.constant 0 : i32
    %c0_i32_3 = arith.constant 0 : i32
    return %c0_i32, %c0_i32_0, %c0_i32_1, %c0_i32_2 : i32, i32, i32, i32
  }
  func.func @transform_2(%arg0: i32, %arg1: i32) -> (i32, i32) {
    %c0_i32 = arith.constant 0 : i32
    %c0_i32_0 = arith.constant 0 : i32
    %c0_i32_1 = arith.constant 0 : i32
    return %c0_i32, %c0_i32_0 : i32, i32
  }
  func.func @transform_3(%arg0: i32, %arg1: i32) -> (i32, i32, i32, i32) {
    %c0_i32 = arith.constant 0 : i32
    %c0_i32_0 = arith.constant 0 : i32
    %c0_i32_1 = arith.constant 0 : i32
    return %arg0, %arg1, %c0_i32, %c0_i32_0 : i32, i32, i32, i32
  }
}

</mosaic_0001>

<llo_original>
// kernel: renderer_encoder.2
$region0: #{renderer_encoder.2}
  #allocation0 [shape = 'u32[]', space=smem, size = 0x4, offset = 0x4, fixed_abs, tag = 'smem constant byte address 0x4 - core index']
  #allocation1 [shape = 'u32[144,128]{1,0:T(1,128)}', space=vmem, size = 0x12000, scoped, tag = 'internal scratch']
  %s0 = inlined_call_operand.vmem [shape: f32[2,1,90,16], index: 0, kind: input, shape index: {}]
  %s1 = inlined_call_operand.vmem [shape: f32[2,2,16,128], index: 1, kind: input, shape index: {}]
  %s2 = inlined_call_operand.vmem [shape: f32[1,128], index: 2, kind: input, shape index: {}]
  %s3 = inlined_call_operand.vmem [shape: f32[2,1,72,128], index: 3, kind: output, shape index: {}]
  %s4 = sld [smem:[#allocation0]]
  $region45: #{renderer_encoder.2} parent=0
    _
  %s6 = ssub.s32 1, %s4
  %s7 = scalar_select 0, %s6, %s4
  loop: start=0, step=1, limit=4
  $region2: #{renderer_encoder.2} parent=0 // loop_pre_header
    _
  $region3: #{renderer_encoder.2} parent=0 // loop_header
    %s9 = sphi 0, %s13
    %p10 = scmp.ge.s32.totalorder %s9, 4
    %s16 = sphi 0, %s28
    %s17 = sphi 0, %s24
    %s18 = sphi 0, %s16
    %s19 = sphi 0, %s17
    %s20 = sphi 0, %s18
    %s21 = sphi 0, %s19
    %s33 = sphi 0, %s35
    %s36 = sphi 0, %s33
    %s37 = sphi 0, %s36
    %s53 = sphi 0, %s37
    %s57 = sphi 0, %s57
    %s59 = sphi 0, %s57
    %s60 = sphi 0, %s59
    %s74 = sphi 0, %s60
    %s78 = sphi 0, %s78
    %s80 = sphi 0, %s78
    %s81 = sphi 0, %s80
    %s95 = sphi 0, %s81
    %s103 = sphi 0, %s105
    %s106 = sphi 0, %s103
    %s107 = sphi 0, %s106
    %s123 = sphi 0, %s107
  $region4: #{renderer_encoder.2} parent=0 // loop_header_branch
    %12 = sbr.rel (%p10) target = $region8
  $region5: #{renderer_encoder.2} parent=0 // loop_body
    %s14 = ssub.s32 %s9, 1
    %s15 = ssub.s32 %s9, 2
    %s22 = sadd.s32 1, %s17
    %p23 = scmp.ge.s32.totalorder %s22, 1
    %s24 = scalar_select %p23, 0, %s22
    %s25 = sadd.s32 1, %s16
    %s26 = scalar_select %p23, %s25, %s16
    %p27 = scmp.ge.s32.totalorder %s26, 2
    %s28 = scalar_select %p27, 0, %s26
    %s29 = ssub.s32 %s16, %s28
    %s30 = ssub.s32 %s17, %s24
    %s31 = sor.u32 %s29, %s30
    %p32 = scmp.eq.s32.totalorder %s31, 0
    %s34 = sadd.s32 %s33, 1
    %s35 = scalar_select %p32, %s33, %s34
    %p38 = pneg %p32
    %p39 = scmp.eq.s32.totalorder %s9, 1
    %p40 = por %p38, %p39
    %p41 = scmp.ne.s32.totalorder %s33, %s36
    %p42 = scmp.eq.s32.totalorder %s9, 0
    %p43 = por %p41, %p42
    %p44 = scmp.ne.s32.totalorder %s33, %s36
    %p45 = scmp.eq.s32.totalorder %s14, 1
    %p46 = por %p44, %p45
    %p47 = scmp.ne.s32.totalorder %s36, %s37
    %p48 = scmp.eq.s32.totalorder %s14, 0
    %p49 = por %p47, %p48
    %p50 = scmp.ne.s32.totalorder %s36, %s37
    %p51 = scmp.eq.s32.totalorder %s15, 1
    %p52 = por %p50, %p51
    %p54 = scmp.ne.s32.totalorder %s37, %s53
    %p55 = scmp.eq.s32.totalorder %s15, 0
    %p56 = por %p54, %p55
    %s58 = sadd.s32 %s57, 1
    %p61 = scmp.eq.s32.totalorder %s9, 1
    %p62 = scmp.ne.s32.totalorder %s57, %s59
    %p63 = scmp.eq.s32.totalorder %s9, 0
    %p64 = por %p62, %p63
    %p65 = scmp.ne.s32.totalorder %s57, %s59
    %p66 = scmp.eq.s32.totalorder %s14, 1
    %p67 = por %p65, %p66
    %p68 = scmp.ne.s32.totalorder %s59, %s60
    %p69 = scmp.eq.s32.totalorder %s14, 0
    %p70 = por %p68, %p69
    %p71 = scmp.ne.s32.totalorder %s59, %s60
    %p72 = scmp.eq.s32.totalorder %s15, 1
    %p73 = por %p71, %p72
    %p75 = scmp.ne.s32.totalorder %s60, %s74
    %p76 = scmp.eq.s32.totalorder %s15, 0
    %p77 = por %p75, %p76
    %s79 = sadd.s32 %s78, 1
    %p82 = scmp.eq.s32.totalorder %s9, 1
    %p83 = scmp.ne.s32.totalorder %s78, %s80
    %p84 = scmp.eq.s32.totalorder %s9, 0
    %p85 = por %p83, %p84
    %p86 = scmp.ne.s32.totalorder %s78, %s80
    %p87 = scmp.eq.s32.totalorder %s14, 1
    %p88 = por %p86, %p87
    %p89 = scmp.ne.s32.totalorder %s80, %s81
    %p90 = scmp.eq.s32.totalorder %s14, 0
    %p91 = por %p89, %p90
    %p92 = scmp.ne.s32.totalorder %s80, %s81
    %p93 = scmp.eq.s32.totalorder %s15, 1
    %p94 = por %p92, %p93
    %p96 = scmp.ne.s32.totalorder %s81, %s95
    %p97 = scmp.eq.s32.totalorder %s15, 0
    %p98 = por %p96, %p97
    %s99 = ssub.s32 %s16, %s28
    %s100 = ssub.s32 %s17, %s24
    %s101 = sor.u32 %s99, %s100
    %p102 = scmp.eq.s32.totalorder %s101, 0
    %s104 = sadd.s32 %s103, 1
    %s105 = scalar_select %p102, %s103, %s104
    %p108 = pneg %p102
    %p109 = scmp.eq.s32.totalorder %s9, 1
    %p110 = por %p108, %p109
    %p111 = scmp.ne.s32.totalorder %s103, %s106
    %p112 = scmp.eq.s32.totalorder %s9, 0
    %p113 = por %p111, %p112
    %p114 = scmp.ne.s32.totalorder %s103, %s106
    %p115 = scmp.eq.s32.totalorder %s14, 1
    %p116 = por %p114, %p115
    %p117 = scmp.ne.s32.totalorder %s106, %s107
    %p118 = scmp.eq.s32.totalorder %s14, 0
    %p119 = por %p117, %p118
    %p120 = scmp.ne.s32.totalorder %s106, %s107
    %p121 = scmp.eq.s32.totalorder %s15, 1
    %p122 = por %p120, %p121
    %p124 = scmp.ne.s32.totalorder %s107, %s123
    %p125 = scmp.eq.s32.totalorder %s15, 0
    %p126 = por %p124, %p125
    %p127 = scmp.le.s32.totalorder 1, %s9
    %p128 = scmp.lt.s32.totalorder %s9, 3
    %p129 = pnand %p127, %p128
    %p130 = pneg %p129
    // Predicated region
    $region9: #{renderer_encoder.2} parent=5 // pred_check
      _
    $region10: #{renderer_encoder.2} parent=5 // pred_check_branch
      %132 = sbr.rel (%p129) target = $region12
    $region11: #{renderer_encoder.2} parent=5 // pred_region
      %s133 = ssub.s32 %s9, 1
      // Predicated region
      $region13: #{renderer_encoder.2} parent=11 // pred_check
        %p134 = pneg %p70
      $region14: #{renderer_encoder.2} parent=11 // pred_check_branch
        %136 = sbr.rel (%p134) target = $region16
      $region15: #{renderer_encoder.2} parent=11 // pred_region
        _
      $region16: #{renderer_encoder.2} parent=11 // pred_fallthru
        _
      // Predicated region
      $region17: #{renderer_encoder.2} parent=11 // pred_check
        %p137 = pneg %p91
      $region18: #{renderer_encoder.2} parent=11 // pred_check_branch
        %139 = sbr.rel (%p137) target = $region20
      $region19: #{renderer_encoder.2} parent=11 // pred_region
        _
      $region20: #{renderer_encoder.2} parent=11 // pred_fallthru
        _
    $region12: #{renderer_encoder.2} parent=5 // pred_fallthru
      _
    %p140 = scmp.lt.s32.totalorder %s9, 2
    // Predicated region
    $region21: #{renderer_encoder.2} parent=5 // pred_check
      %p141 = pneg %p140
    $region22: #{renderer_encoder.2} parent=5 // pred_check_branch
      %143 = sbr.rel (%p141) target = $region24
    $region23: #{renderer_encoder.2} parent=5 // pred_region
      // Predicated region
      $region25: #{renderer_encoder.2} parent=23 // pred_check
        %p144 = pneg %p43
      $region26: #{renderer_encoder.2} parent=23 // pred_check_branch
        %146 = sbr.rel (%p144) target = $region28
      $region27: #{renderer_encoder.2} parent=23 // pred_region
        %p147 = scmp.lt.s32.totalorder %s16, 1
        %s148 = scalar_select %p147, %s16, 1
        %p149 = scmp.lt.s32.totalorder %s17, 0
        %s150 = scalar_select %p149, %s17, 0
        %s151 = smul.addr %s150, 12
        %s152 = smul.addr %s148, 12
        %s153 = sadd.s32 %s151, %s152
        %s154 = smul.addr %s153, 8
        %s155 = scalar_lea.vmem %s0, %s154
      $region28: #{renderer_encoder.2} parent=23 // pred_fallthru
        _
    $region24: #{renderer_encoder.2} parent=5 // pred_fallthru
      _
    %p156 = scmp.le.s32.totalorder 1, %s9
    %p157 = scmp.lt.s32.totalorder %s9, 3
    %p158 = pnand %p156, %p157
    %p159 = pneg %p158
    // Predicated region
    $region29: #{renderer_encoder.2} parent=5 // pred_check
      _
    $region30: #{renderer_encoder.2} parent=5 // pred_check_branch
      %161 = sbr.rel (%p158) target = $region32
    $region31: #{renderer_encoder.2} parent=5 // pred_region
      %s162 = ssub.s32 %s9, 1
      %p163 = scmp.lt.s32.totalorder %s18, 1
      %s164 = scalar_select %p163, %s18, 1
      %p165 = scmp.lt.s32.totalorder %s19, 0
      %s166 = scalar_select %p165, %s19, 0
      %s167 = smul.addr %s166, 12
      %s168 = smul.addr %s164, 12
      %s169 = sadd.s32 %s167, %s168
      %s170 = smul.addr %s169, 8
      %s171 = scalar_lea.vmem %s0, %s170
      %p172 = pneg %p49
      %p173 = pneg %p46
      %p174 = pneg %p70
      %p175 = pneg %p67
      %p176 = pneg %p91
      %p177 = pneg %p88
      %p178 = pneg %p119
      %p179 = pneg %p116
      %p180 = scmp.lt.s32.totalorder %s18, 1
      %s181 = scalar_select %p180, %s18, 1
      %p182 = scmp.lt.s32.totalorder %s19, 0
      %s183 = scalar_select %p182, %s19, 0
      %s184 = smul.addr %s183, 9
      %s185 = smul.addr %s181, 9
      %s186 = sadd.s32 %s184, %s185
      %s187 = smul.addr %s186, 8
      %s188 = scalar_lea.vmem %s3, %s187
      %p189 = scmp.lt.s32.totalorder %s18, 1
      %s190 = scalar_select %p189, %s18, 1
      %p191 = scmp.lt.s32.totalorder %s19, 0
      %s192 = scalar_select %p191, %s19, 0
      %s193 = smul.addr %s192, 12
      %s194 = smul.addr %s190, 12
      %s195 = sadd.s32 %s193, %s194
      %s196 = smul.addr %s195, 8
      %s197 = scalar_lea.vmem %s0, %s196
      %p198 = scmp.lt.s32.totalorder %s18, 1
      %s199 = scalar_select %p198, %s18, 1
      %p200 = scmp.lt.s32.totalorder %s19, 0
      %s201 = scalar_select %p200, %s19, 0
      %s202 = smul.addr %s201, 9
      %s203 = smul.addr %s199, 9
      %s204 = sadd.s32 %s202, %s203
      %s205 = smul.addr %s204, 8
      %s206 = scalar_lea.vmem %s3, %s205
      %v207 = vld [vmem:[%s197] sm:$0xff]
      %v208 = vld [vmem:[%s197 + $0x8] sm:$0xff]
      %v209 = vld [vmem:[%s197 + $0x10] sm:$0xff]
      %v210 = vld [vmem:[%s197 + $0x18] sm:$0xff]
      %v211 = vld [vmem:[%s197 + $0x20] sm:$0xff]
      %v212 = vld [vmem:[%s197 + $0x28] sm:$0xff]
      %v213 = vld [vmem:[%s197 + $0x30] sm:$0xff]
      %v214 = vld [vmem:[%s197 + $0x38] sm:$0xff]
      %v215 = vld [vmem:[%s197 + $0x40] sm:$0xff]
      %v216 = vld [vmem:[%s1] sm:$0xff]
      %v217 = vld [vmem:[%s1 + $0x8] sm:$0xff]
      %v218 = vld [vmem:[%s197 + $0x1] sm:$0xff]
      %v219 = vld [vmem:[%s197 + $0x9] sm:$0xff]
      %v220 = vld [vmem:[%s197 + $0x11] sm:$0xff]
      %v221 = vld [vmem:[%s197 + $0x19] sm:$0xff]
      %v222 = vld [vmem:[%s197 + $0x21] sm:$0xff]
      %v223 = vld [vmem:[%s197 + $0x29] sm:$0xff]
      %v224 = vld [vmem:[%s197 + $0x31] sm:$0xff]
      %v225 = vld [vmem:[%s197 + $0x39] sm:$0xff]
      %v226 = vld [vmem:[%s197 + $0x41] sm:$0xff]
      %s227 = scalar_lea.vmem %s1, 16
      %v228 = vld [vmem:[%s227] sm:$0xff]
      %v229 = vld [vmem:[%s227 + $0x8] sm:$0xff]
      %vm230 = vcmask 130048
      %v232 = vsel %vm230, %v218, 0
      %v235 = vsel %vm230, %v219, 0
      %v238 = vsel %vm230, %v220, 0
      %v241 = vsel %vm230, %v221, 0
      %v244 = vsel %vm230, %v222, 0
      %v247 = vsel %vm230, %v223, 0
      %v250 = vsel %vm230, %v224, 0
      %v253 = vsel %vm230, %v225, 0
      %v256 = vsel %vm230, %v226, 0
      %258 = vmatprep.subr.mxu0 0.0
      %259 = vmatpush1.msra.mxu0 %v228
      %260 = vmatprep.subr.mxu0 0.0
      %261 = vmatpush1.msra.mxu0 %v229
      %262 = vmatprep.subr.mxu0 0.0
      %263 = vmatpush1.msra.mxu0 0.0
      %264 = vmatprep.subr.mxu0 0.0
      %265 = vmatpush1.msra.mxu0 0.0
      %266 = vmatprep.subr.mxu0 0.0
      %267 = vmatpush1.msra.mxu0 0.0
      %268 = vmatprep.subr.mxu0 0.0
      %269 = vmatpush1.msra.mxu0 0.0
      %270 = vmatprep.subr.mxu0 0.0
      %271 = vmatpush1.msra.mxu0 0.0
      %272 = vmatprep.subr.mxu0 0.0
      %273 = vmatpush1.msra.mxu0 0.0
      %274 = vmatprep.subr.mxu0 0.0
      %275 = vmatpush1.msra.mxu0 0.0
      %276 = vmatprep.subr.mxu0 0.0
      %277 = vmatpush1.msra.mxu0 0.0
      %278 = vmatprep.subr.mxu0 0.0
      %279 = vmatpush1.msra.mxu0 0.0
      %280 = vmatprep.subr.mxu0 0.0
      %281 = vmatpush1.msra.mxu0 0.0
      %282 = vmatprep.subr.mxu0 0.0
      %283 = vmatpush1.msra.mxu0 0.0
      %284 = vmatprep.subr.mxu0 0.0
      %285 = vmatpush1.msra.mxu0 0.0
      %286 = vmatprep.subr.mxu0 0.0
      %287 = vmatpush1.msra.mxu0 0.0
      %288 = vmatprep.subr.mxu0 0.0
      %289 = vmatpush1.msra.mxu0 0.0
      %290 = vmatprep.subr.mxu0 0.0
      %291 = vmatpush1.msra.mxu0 0.0
      %292 = vmatprep.subr.mxu0 0.0
      %293 = vmatpush1.msra.mxu0 0.0
      %294 = vmatprep.subr.mxu0 0.0
      %295 = vmatpush1.msra.mxu0 0.0
      %296 = vmatprep.subr.mxu0 0.0
      %297 = vmatpush1.msra.mxu0 0.0
      %298 = vmatprep.subr.mxu0 0.0
      %299 = vmatpush1.msra.mxu0 0.0
      %300 = vmatprep.subr.mxu0 0.0
      %301 = vmatpush1.msra.mxu0 0.0
      %302 = vmatprep.subr.mxu0 0.0
      %303 = vmatpush1.msra.mxu0 0.0
      %304 = vmatprep.subr.mxu0 0.0
      %305 = vmatpush1.msra.mxu0 0.0
      %306 = vmatprep.subr.mxu0 0.0
      %307 = vmatpush1.msra.mxu0 0.0
      %308 = vmatprep.subr.mxu0 0.0
      %309 = vmatpush1.msra.mxu0 0.0
      %310 = vmatprep.subr.mxu0 0.0
      %311 = vmatpush1.msra.mxu0 0.0
      %312 = vmatprep.subr.mxu0 0.0
      %313 = vmatpush1.msra.mxu0 0.0
      %314 = vmatprep.subr.mxu0 0.0
      %315 = vmatpush1.msra.mxu0 0.0
      %316 = vmatprep.subr.mxu0 0.0
      %317 = vmatpush1.msra.mxu0 0.0
      %318 = vmatprep.subr.mxu0 0.0
      %319 = vmatpush1.msra.mxu0 0.0
      %320 = vmatprep.subr.mxu0 0.0
      %321 = vmatpush1.msra.mxu0 0.0
      %322 = vmatprep.mubr.f32.mxu0 0.0
      %323 = vmatmul.mubr.f32.gmra.mrb[0].mxu0 %v232
      %v324 = vpop.f32.mrb[0].mxu0
      %v325 = vadd.f32 0.0, %v324
      %v326 = vpop.f32.mrb[0].mxu0
      %327 = vmatprep.mubr.f32.mxu0 0.0
      %328 = vmatmul.mubr.f32.gmra.mrb[0].mxu0 %v235
      %v329 = vpop.f32.mrb[0].mxu0
      %v330 = vadd.f32 0.0, %v329
      %v331 = vpop.f32.mrb[0].mxu0
      %332 = vmatprep.mubr.f32.mxu0 0.0
      %333 = vmatmul.mubr.f32.gmra.mrb[0].mxu0 %v238
      %v334 = vpop.f32.mrb[0].mxu0
      %v335 = vadd.f32 0.0, %v334
      %v336 = vpop.f32.mrb[0].mxu0
      %337 = vmatprep.mubr.f32.mxu0 0.0
      %338 = vmatmul.mubr.f32.gmra.mrb[0].mxu0 %v241
      %v339 = vpop.f32.mrb[0].mxu0
      %v340 = vadd.f32 0.0, %v339
      %v341 = vpop.f32.mrb[0].mxu0
      %342 = vmatprep.mubr.f32.mxu0 0.0
      %343 = vmatmul.mubr.f32.gmra.mrb[0].mxu0 %v244
      %v344 = vpop.f32.mrb[0].mxu0
      %v345 = vadd.f32 0.0, %v344
      %v346 = vpop.f32.mrb[0].mxu0
      %347 = vmatprep.mubr.f32.mxu0 0.0
      %348 = vmatmul.mubr.f32.gmra.mrb[0].mxu0 %v247
      %v349 = vpop.f32.mrb[0].mxu0
      %v350 = vadd.f32 0.0, %v349
      %v351 = vpop.f32.mrb[0].mxu0
      %352 = vmatprep.mubr.f32.mxu0 0.0
      %353 = vmatmul.mubr.f32.gmra.mrb[0].mxu0 %v250
      %v354 = vpop.f32.mrb[0].mxu0
      %v355 = vadd.f32 0.0, %v354
      %v356 = vpop.f32.mrb[0].mxu0
      %357 = vmatprep.mubr.f32.mxu0 0.0
      %358 = vmatmul.mubr.f32.gmra.mrb[0].mxu0 %v253
      %v359 = vpop.f32.mrb[0].mxu0
      %v360 = vadd.f32 0.0, %v359
      %v361 = vpop.f32.mrb[0].mxu0
      %362 = vmatprep.mubr.f32.mxu0 0.0
      %363 = vmatmul.mubr.f32.gmra.mrb[0].mxu0 %v256
      %v364 = vpop.f32.mrb[0].mxu0
      %v365 = vadd.f32 0.0, %v364
      %v366 = vpop.f32.mrb[0].mxu0
      %367 = vdwg.mxu0
      %v369 = vsel %vm230, %v207, 0
      %v372 = vsel %vm230, %v208, 0
      %v375 = vsel %vm230, %v209, 0
      %v378 = vsel %vm230, %v210, 0
      %v381 = vsel %vm230, %v211, 0
      %v384 = vsel %vm230, %v212, 0
      %v387 = vsel %vm230, %v213, 0
      %v390 = vsel %vm230, %v214, 0
      %v393 = vsel %vm230, %v215, 0
      %395 = vmatprep.subr.mxu0 0.0
      %396 = vmatpush1.msra.mxu0 %v216
      %397 = vmatprep.subr.mxu0 0.0
      %398 = vmatpush1.msra.mxu0 %v217
      %399 = vmatprep.subr.mxu0 0.0
      %400 = vmatpush1.msra.mxu0 0.0
      %401 = vmatprep.subr.mxu0 0.0
      %402 = vmatpush1.msra.mxu0 0.0
      %403 = vmatprep.subr.mxu0 0.0
      %404 = vmatpush1.msra.mxu0 0.0
      %405 = vmatprep.subr.mxu0 0.0
      %406 = vmatpush1.msra.mxu0 0.0
      %407 = vmatprep.subr.mxu0 0.0
      %408 = vmatpush1.msra.mxu0 0.0
      %409 = vmatprep.subr.mxu0 0.0
      %410 = vmatpush1.msra.mxu0 0.0
      %411 = vmatprep.subr.mxu0 0.0
      %412 = vmatpush1.msra.mxu0 0.0
      %413 = vmatprep.subr.mxu0 0.0
      %414 = vmatpush1.msra.mxu0 0.0
      %415 = vmatprep.subr.mxu0 0.0
      %416 = vmatpush1.msra.mxu0 0.0
      %417 = vmatprep.subr.mxu0 0.0
      %418 = vmatpush1.msra.mxu0 0.0
      %419 = vmatprep.subr.mxu0 0.0
      %420 = vmatpush1.msra.mxu0 0.0
      %421 = vmatprep.subr.mxu0 0.0
      %422 = vmatpush1.msra.mxu0 0.0
      %423 = vmatprep.subr.mxu0 0.0
      %424 = vmatpush1.msra.mxu0 0.0
      %425 = vmatprep.subr.mxu0 0.0
      %426 = vmatpush1.msra.mxu0 0.0
      %427 = vmatprep.subr.mxu0 0.0
      %428 = vmatpush1.msra.mxu0 0.0
      %429 = vmatprep.subr.mxu0 0.0
      %430 = vmatpush1.msra.mxu0 0.0
      %431 = vmatprep.subr.mxu0 0.0
      %432 = vmatpush1.msra.mxu0 0.0
      %433 = vmatprep.subr.mxu0 0.0
      %434 = vmatpush1.msra.mxu0 0.0
      %435 = vmatprep.subr.mxu0 0.0
      %436 = vmatpush1.msra.mxu0 0.0
      %437 = vmatprep.subr.mxu0 0.0
      %438 = vmatpush1.msra.mxu0 0.0
      %439 = vmatprep.subr.mxu0 0.0
      %440 = vmatpush1.msra.mxu0 0.0
      %441 = vmatprep.subr.mxu0 0.0
      %442 = vmatpush1.msra.mxu0 0.0
      %443 = vmatprep.subr.mxu0 0.0
      %444 = vmatpush1.msra.mxu0 0.0
      %445 = vmatprep.subr.mxu0 0.0
      %446 = vmatpush1.msra.mxu0 0.0
      %447 = vmatprep.subr.mxu0 0.0
      %448 = vmatpush1.msra.mxu0 0.0
      %449 = vmatprep.subr.mxu0 0.0
      %450 = vmatpush1.msra.mxu0 0.0
      %451 = vmatprep.subr.mxu0 0.0
      %452 = vmatpush1.msra.mxu0 0.0
      %453 = vmatprep.subr.mxu0 0.0
      %454 = vmatpush1.msra.mxu0 0.0
      %455 = vmatprep.subr.mxu0 0.0
      %456 = vmatpush1.msra.mxu0 0.0
      %457 = vmatprep.subr.mxu0 0.0
      %458 = vmatpush1.msra.mxu0 0.0
      %459 = vmatprep.mubr.f32.mxu0 0.0
      %460 = vmatmul.mubr.f32.gmra.mrb[0].mxu0 %v369
      %v461 = vpop.f32.mrb[0].mxu0
      %v462 = vadd.f32 %v325, %v461
      %v463 = vpop.f32.mrb[0].mxu0
      %464 = vmatprep.mubr.f32.mxu0 0.0
      %465 = vmatmul.mubr.f32.gmra.mrb[0].mxu0 %v372
      %v466 = vpop.f32.mrb[0].mxu0
      %v467 = vadd.f32 %v330, %v466
      %v468 = vpop.f32.mrb[0].mxu0
      %469 = vmatprep.mubr.f32.mxu0 0.0
      %470 = vmatmul.mubr.f32.gmra.mrb[0].mxu0 %v375
      %v471 = vpop.f32.mrb[0].mxu0
      %v472 = vadd.f32 %v335, %v471
      %v473 = vpop.f32.mrb[0].mxu0
      %474 = vmatprep.mubr.f32.mxu0 0.0
      %475 = vmatmul.mubr.f32.gmra.mrb[0].mxu0 %v378
      %v476 = vpop.f32.mrb[0].mxu0
      %v477 = vadd.f32 %v340, %v476
      %v478 = vpop.f32.mrb[0].mxu0
      %479 = vmatprep.mubr.f32.mxu0 0.0
      %480 = vmatmul.mubr.f32.gmra.mrb[0].mxu0 %v381
      %v481 = vpop.f32.mrb[0].mxu0
      %v482 = vadd.f32 %v345, %v481
      %v483 = vpop.f32.mrb[0].mxu0
      %484 = vmatprep.mubr.f32.mxu0 0.0
      %485 = vmatmul.mubr.f32.gmra.mrb[0].mxu0 %v384
      %v486 = vpop.f32.mrb[0].mxu0
      %v487 = vadd.f32 %v350, %v486
      %v488 = vpop.f32.mrb[0].mxu0
      %489 = vmatprep.mubr.f32.mxu0 0.0
      %490 = vmatmul.mubr.f32.gmra.mrb[0].mxu0 %v387
      %v491 = vpop.f32.mrb[0].mxu0
      %v492 = vadd.f32 %v355, %v491
      %v493 = vpop.f32.mrb[0].mxu0
      %494 = vmatprep.mubr.f32.mxu0 0.0
      %495 = vmatmul.mubr.f32.gmra.mrb[0].mxu0 %v390
      %v496 = vpop.f32.mrb[0].mxu0
      %v497 = vadd.f32 %v360, %v496
      %v498 = vpop.f32.mrb[0].mxu0
      %499 = vmatprep.mubr.f32.mxu0 0.0
      %500 = vmatmul.mubr.f32.gmra.mrb[0].mxu0 %v393
      %v501 = vpop.f32.mrb[0].mxu0
      %v502 = vadd.f32 %v365, %v501
      %v503 = vpop.f32.mrb[0].mxu0
      %504 = vdwg.mxu0
      %v505 = vld [vmem:[%s197 + $0x9] sm:$0xff]
      %v506 = vld [vmem:[%s197 + $0x11] sm:$0xff]
      %v507 = vld [vmem:[%s197 + $0x19] sm:$0xff]
      %v508 = vld [vmem:[%s197 + $0x21] sm:$0xff]
      %v509 = vld [vmem:[%s197 + $0x29] sm:$0xff]
      %v510 = vld [vmem:[%s197 + $0x31] sm:$0xff]
      %v511 = vld [vmem:[%s197 + $0x39] sm:$0xff]
      %v512 = vld [vmem:[%s197 + $0x41] sm:$0xff]
      %v513 = vld [vmem:[%s197 + $0x49] sm:$0xff]
      %s514 = scalar_lea.vmem %s1, 32
      %v515 = vld [vmem:[%s514] sm:$0xff]
      %v516 = vld [vmem:[%s514 + $0x8] sm:$0xff]
      %v518 = vsel %vm230, %v505, 0
      %v521 = vsel %vm230, %v506, 0
      %v524 = vsel %vm230, %v507, 0
      %v527 = vsel %vm230, %v508, 0
      %v530 = vsel %vm230, %v509, 0
      %v533 = vsel %vm230, %v510, 0
      %v536 = vsel %vm230, %v511, 0
      %v539 = vsel %vm230, %v512, 0
      %v542 = vsel %vm230, %v513, 0
      %544 = vmatprep.subr.mxu0 0.0
      %545 = vmatpush1.msra.mxu0 %v515
      %546 = vmatprep.subr.mxu0 0.0
      %547 = vmatpush1.msra.mxu0 %v516
      %548 = vmatprep.subr.mxu0 0.0
      %549 = vmatpush1.msra.mxu0 0.0
      %550 = vmatprep.subr.mxu0 0.0
      %551 = vmatpush1.msra.mxu0 0.0
      %552 = vmatprep.subr.mxu0 0.0
      %553 = vmatpush1.msra.mxu0 0.0
      %554 = vmatprep.subr.mxu0 0.0
      %555 = vmatpush1.msra.mxu0 0.0
      %556 = vmatprep.subr.mxu0 0.0
      %557 = vmatpush1.msra.mxu0 0.0
      %558 = vmatprep.subr.mxu0 0.0
      %559 = vmatpush1.msra.mxu0 0.0
      %560 = vmatprep.subr.mxu0 0.0
      %561 = vmatpush1.msra.mxu0 0.0
      %562 = vmatprep.subr.mxu0 0.0
      %563 = vmatpush1.msra.mxu0 0.0
      %564 = vmatprep.subr.mxu0 0.0
      %565 = vmatpush1.msra.mxu0 0.0
      %566 = vmatprep.subr.mxu0 0.0
      %567 = vmatpush1.msra.mxu0 0.0
      %568 = vmatprep.subr.mxu0 0.0
      %569 = vmatpush1.msra.mxu0 0.0
      %570 = vmatprep.subr.mxu0 0.0
      %571 = vmatpush1.msra.mxu0 0.0
      %572 = vmatprep.subr.mxu0 0.0
      %573 = vmatpush1.msra.mxu0 0.0
      %574 = vmatprep.subr.mxu0 0.0
      %575 = vmatpush1.msra.mxu0 0.0
      %576 = vmatprep.subr.mxu0 0.0
      %577 = vmatpush1.msra.mxu0 0.0
      %578 = vmatprep.subr.mxu0 0.0
      %579 = vmatpush1.msra.mxu0 0.0
      %580 = vmatprep.subr.mxu0 0.0
      %581 = vmatpush1.msra.mxu0 0.0
      %582 = vmatprep.subr.mxu0 0.0
      %583 = vmatpush1.msra.mxu0 0.0
      %584 = vmatprep.subr.mxu0 0.0
      %585 = vmatpush1.msra.mxu0 0.0
      %586 = vmatprep.subr.mxu0 0.0
      %587 = vmatpush1.msra.mxu0 0.0
      %588 = vmatprep.subr.mxu0 0.0
      %589 = vmatpush1.msra.mxu0 0.0
      %590 = vmatprep.subr.mxu0 0.0
      %591 = vmatpush1.msra.mxu0 0.0
      %592 = vmatprep.subr.mxu0 0.0
      %593 = vmatpush1.msra.mxu0 0.0
      %594 = vmatprep.subr.mxu0 0.0
      %595 = vmatpush1.msra.mxu0 0.0
      %596 = vmatprep.subr.mxu0 0.0
      %597 = vmatpush1.msra.mxu0 0.0
      %598 = vmatprep.subr.mxu0 0.0
      %599 = vmatpush1.msra.mxu0 0.0
      %600 = vmatprep.subr.mxu0 0.0
      %601 = vmatpush1.msra.mxu0 0.0
      %602 = vmatprep.subr.mxu0 0.0
      %603 = vmatpush1.msra.mxu0 0.0
      %604 = vmatprep.subr.mxu0 0.0
      %605 = vmatpush1.msra.mxu0 0.0
      %606 = vmatprep.subr.mxu0 0.0
      %607 = vmatpush1.msra.mxu0 0.0
      %608 = vmatprep.mubr.f32.mxu0 0.0
      %609 = vmatmul.mubr.f32.gmra.mrb[0].mxu0 %v518
      %v610 = vpop.f32.mrb[0].mxu0
      %v611 = vadd.f32 0.0, %v610
      %v612 = vpop.f32.mrb[0].mxu0
      %613 = vmatprep.mubr.f32.mxu0 0.0
      %614 = vmatmul.mubr.f32.gmra.mrb[0].mxu0 %v521
      %v615 = vpop.f32.mrb[0].mxu0
      %v616 = vadd.f32 0.0, %v615
      %v617 = vpop.f32.mrb[0].mxu0
      %618 = vmatprep.mubr.f32.mxu0 0.0
      %619 = vmatmul.mubr.f32.gmra.mrb[0].mxu0 %v524
      %v620 = vpop.f32.mrb[0].mxu0
      %v621 = vadd.f32 0.0, %v620
      %v622 = vpop.f32.mrb[0].mxu0
      %623 = vmatprep.mubr.f32.mxu0 0.0
      %624 = vmatmul.mubr.f32.gmra.mrb[0].mxu0 %v527
      %v625 = vpop.f32.mrb[0].mxu0
      %v626 = vadd.f32 0.0, %v625
      %v627 = vpop.f32.mrb[0].mxu0
      %628 = vmatprep.mubr.f32.mxu0 0.0
      %629 = vmatmul.mubr.f32.gmra.mrb[0].mxu0 %v530
      %v630 = vpop.f32.mrb[0].mxu0
      %v631 = vadd.f32 0.0, %v630
      %v632 = vpop.f32.mrb[0].mxu0
      %633 = vmatprep.mubr.f32.mxu0 0.0
      %634 = vmatmul.mubr.f32.gmra.mrb[0].mxu0 %v533
      %v635 = vpop.f32.mrb[0].mxu0
      %v636 = vadd.f32 0.0, %v635
      %v637 = vpop.f32.mrb[0].mxu0
      %638 = vmatprep.mubr.f32.mxu0 0.0
      %639 = vmatmul.mubr.f32.gmra.mrb[0].mxu0 %v536
      %v640 = vpop.f32.mrb[0].mxu0
      %v641 = vadd.f32 0.0, %v640
      %v642 = vpop.f32.mrb[0].mxu0
      %643 = vmatprep.mubr.f32.mxu0 0.0
      %644 = vmatmul.mubr.f32.gmra.mrb[0].mxu0 %v539
      %v645 = vpop.f32.mrb[0].mxu0
      %v646 = vadd.f32 0.0, %v645
      %v647 = vpop.f32.mrb[0].mxu0
      %648 = vmatprep.mubr.f32.mxu0 0.0
      %649 = vmatmul.mubr.f32.gmra.mrb[0].mxu0 %v542
      %v650 = vpop.f32.mrb[0].mxu0
      %v651 = vadd.f32 0.0, %v650
      %v652 = vpop.f32.mrb[0].mxu0
      %653 = vdwg.mxu0
      %v654 = vadd.f32 %v462, %v611
      %v655 = vadd.f32 %v467, %v616
      %v656 = vadd.f32 %v472, %v621
      %v657 = vadd.f32 %v477, %v626
      %v658 = vadd.f32 %v482, %v631
      %v659 = vadd.f32 %v487, %v636
      %v660 = vadd.f32 %v492, %v641
      %v661 = vadd.f32 %v497, %v646
      %v662 = vadd.f32 %v502, %v651
      %v663 = vld [vmem:[%s197 + $0xa] sm:$0xff]
      %v664 = vld [vmem:[%s197 + $0x12] sm:$0xff]
      %v665 = vld [vmem:[%s197 + $0x1a] sm:$0xff]
      %v666 = vld [vmem:[%s197 + $0x22] sm:$0xff]
      %v667 = vld [vmem:[%s197 + $0x2a] sm:$0xff]
      %v668 = vld [vmem:[%s197 + $0x32] sm:$0xff]
      %v669 = vld [vmem:[%s197 + $0x3a] sm:$0xff]
      %v670 = vld [vmem:[%s197 + $0x42] sm:$0xff]
      %v671 = vld [vmem:[%s197 + $0x4a] sm:$0xff]
      %s672 = scalar_lea.vmem %s1, 48
      %v673 = vld [vmem:[%s672] sm:$0xff]
      %v674 = vld [vmem:[%s672 + $0x8] sm:$0xff]
      %v676 = vsel %vm230, %v663, 0
      %v679 = vsel %vm230, %v664, 0
      %v682 = vsel %vm230, %v665, 0
      %v685 = vsel %vm230, %v666, 0
      %v688 = vsel %vm230, %v667, 0
      %v691 = vsel %vm230, %v668, 0
      %v694 = vsel %vm230, %v669, 0
      %v697 = vsel %vm230, %v670, 0
      %v700 = vsel %vm230, %v671, 0
      %702 = vmatprep.subr.mxu0 0.0
      %703 = vmatpush1.msra.mxu0 %v673
      %704 = vmatprep.subr.mxu0 0.0
      %705 = vmatpush1.msra.mxu0 %v674
      %706 = vmatprep.subr.mxu0 0.0
      %707 = vmatpush1.msra.mxu0 0.0
      %708 = vmatprep.subr.mxu0 0.0
      %709 = vmatpush1.msra.mxu0 0.0
      %710 = vmatprep.subr.mxu0 0.0
      %711 = vmatpush1.msra.mxu0 0.0
      %712 = vmatprep.subr.mxu0 0.0
      %713 = vmatpush1.msra.mxu0 0.0
      %714 = vmatprep.subr.mxu0 0.0
      %715 = vmatpush1.msra.mxu0 0.0
      %716 = vmatprep.subr.mxu0 0.0
      %717 = vmatpush1.msra.mxu0 0.0
      %718 = vmatprep.subr.mxu0 0.0
      %719 = vmatpush1.msra.mxu0 0.0
      %720 = vmatprep.subr.mxu0 0.0
      %721 = vmatpush1.msra.mxu0 0.0
      %722 = vmatprep.subr.mxu0 0.0
      %723 = vmatpush1.msra.mxu0 0.0
      %724 = vmatprep.subr.mxu0 0.0
      %725 = vmatpush1.msra.mxu0 0.0
      %726 = vmatprep.subr.mxu0 0.0
      %727 = vmatpush1.msra.mxu0 0.0
      %728 = vmatprep.subr.mxu0 0.0
      %729 = vmatpush1.msra.mxu0 0.0
      %730 = vmatprep.subr.mxu0 0.0
      %731 = vmatpush1.msra.mxu0 0.0
      %732 = vmatprep.subr.mxu0 0.0
      %733 = vmatpush1.msra.mxu0 0.0
      %734 = vmatprep.subr.mxu0 0.0
      %735 = vmatpush1.msra.mxu0 0.0
      %736 = vmatprep.subr.mxu0 0.0
      %737 = vmatpush1.msra.mxu0 0.0
      %738 = vmatprep.subr.mxu0 0.0
      %739 = vmatpush1.msra.mxu0 0.0
      %740 = vmatprep.subr.mxu0 0.0
      %741 = vmatpush1.msra.mxu0 0.0
      %742 = vmatprep.subr.mxu0 0.0
      %743 = vmatpush1.msra.mxu0 0.0
      %744 = vmatprep.subr.mxu0 0.0
      %745 = vmatpush1.msra.mxu0 0.0
      %746 = vmatprep.subr.mxu0 0.0
      %747 = vmatpush1.msra.mxu0 0.0
      %748 = vmatprep.subr.mxu0 0.0
      %749 = vmatpush1.msra.mxu0 0.0
      %750 = vmatprep.subr.mxu0 0.0
      %751 = vmatpush1.msra.mxu0 0.0
      %752 = vmatprep.subr.mxu0 0.0
      %753 = vmatpush1.msra.mxu0 0.0
      %754 = vmatprep.subr.mxu0 0.0
      %755 = vmatpush1.msra.mxu0 0.0
      %756 = vmatprep.subr.mxu0 0.0
      %757 = vmatpush1.msra.mxu0 0.0
      %758 = vmatprep.subr.mxu0 0.0
      %759 = vmatpush1.msra.mxu0 0.0
      %760 = vmatprep.subr.mxu0 0.0
      %761 = vmatpush1.msra.mxu0 0.0
      %762 = vmatprep.subr.mxu0 0.0
      %763 = vmatpush1.msra.mxu0 0.0
      %764 = vmatprep.subr.mxu0 0.0
      %765 = vmatpush1.msra.mxu0 0.0
      %766 = vmatprep.mubr.f32.mxu0 0.0
      %767 = vmatmul.mubr.f32.gmra.mrb[0].mxu0 %v676
      %v768 = vpop.f32.mrb[0].mxu0
      %v769 = vadd.f32 0.0, %v768
      %v770 = vpop.f32.mrb[0].mxu0
      %771 = vmatprep.mubr.f32.mxu0 0.0
      %772 = vmatmul.mubr.f32.gmra.mrb[0].mxu0 %v679
      %v773 = vpop.f32.mrb[0].mxu0
      %v774 = vadd.f32 0.0, %v773
      %v775 = vpop.f32.mrb[0].mxu0
      %776 = vmatprep.mubr.f32.mxu0 0.0
      %777 = vmatmul.mubr.f32.gmra.mrb[0].mxu0 %v682
      %v778 = vpop.f32.mrb[0].mxu0
      %v779 = vadd.f32 0.0, %v778
      %v780 = vpop.f32.mrb[0].mxu0
      %781 = vmatprep.mubr.f32.mxu0 0.0
      %782 = vmatmul.mubr.f32.gmra.mrb[0].mxu0 %v685
      %v783 = vpop.f32.mrb[0].mxu0
      %v784 = vadd.f32 0.0, %v783
      %v785 = vpop.f32.mrb[0].mxu0
      %786 = vmatprep.mubr.f32.mxu0 0.0
      %787 = vmatmul.mubr.f32.gmra.mrb[0].mxu0 %v688
      %v788 = vpop.f32.mrb[0].mxu0
      %v789 = vadd.f32 0.0, %v788
      %v790 = vpop.f32.mrb[0].mxu0
      %791 = vmatprep.mubr.f32.mxu0 0.0
      %792 = vmatmul.mubr.f32.gmra.mrb[0].mxu0 %v691
      %v793 = vpop.f32.mrb[0].mxu0
      %v794 = vadd.f32 0.0, %v793
      %v795 = vpop.f32.mrb[0].mxu0
      %796 = vmatprep.mubr.f32.mxu0 0.0
      %797 = vmatmul.mubr.f32.gmra.mrb[0].mxu0 %v694
      %v798 = vpop.f32.mrb[0].mxu0
      %v799 = vadd.f32 0.0, %v798
      %v800 = vpop.f32.mrb[0].mxu0
      %801 = vmatprep.mubr.f32.mxu0 0.0
      %802 = vmatmul.mubr.f32.gmra.mrb[0].mxu0 %v697
      %v803 = vpop.f32.mrb[0].mxu0
      %v804 = vadd.f32 0.0, %v803
      %v805 = vpop.f32.mrb[0].mxu0
      %806 = vmatprep.mubr.f32.mxu0 0.0
      %807 = vmatmul.mubr.f32.gmra.mrb[0].mxu0 %v700
      %v808 = vpop.f32.mrb[0].mxu0
      %v809 = vadd.f32 0.0, %v808
      %v810 = vpop.f32.mrb[0].mxu0
      %811 = vdwg.mxu0
      %v812 = vadd.f32 %v654, %v769
      %v813 = vadd.f32 %v655, %v774
      %v814 = vadd.f32 %v656, %v779
      %v815 = vadd.f32 %v657, %v784
      %v816 = vadd.f32 %v658, %v789
      %v817 = vadd.f32 %v659, %v794
      %v818 = vadd.f32 %v660, %v799
      %v819 = vadd.f32 %v661, %v804
      %v820 = vadd.f32 %v662, %v809
      %v821 = vld [vmem:[%s2] sm:$0x1]
      %v823 = vlaneseq
      %v824 = vshrl.u32 %v823, 7
      %v825 = vsub.s32 0, %v824
      %v826 = vrot.slane %v821, %v825
      %v828 = vadd.f32 %v812, %v826
      %v829 = vadd.f32 %v813, %v826
      %v830 = vadd.f32 %v814, %v826
      %v831 = vadd.f32 %v815, %v826
      %v832 = vadd.f32 %v816, %v826
      %v833 = vadd.f32 %v817, %v826
      %v834 = vadd.f32 %v818, %v826
      %v835 = vadd.f32 %v819, %v826
      %v836 = vadd.f32 %v820, %v826
      %v837 = vmax.f32 %v828, 0.0
      %v838 = vmax.f32 %v829, 0.0
      %v839 = vmax.f32 %v830, 0.0
      %v840 = vmax.f32 %v831, 0.0
      %v841 = vmax.f32 %v832, 0.0
      %v842 = vmax.f32 %v833, 0.0
      %v843 = vmax.f32 %v834, 0.0
      %v844 = vmax.f32 %v835, 0.0
      %v845 = vmax.f32 %v836, 0.0
      %846 = vst [vmem:[%s206] sm:$0xff] %v837
      %847 = vst [vmem:[%s206 + $0x8] sm:$0xff] %v838
      %848 = vst [vmem:[%s206 + $0x10] sm:$0xff] %v839
      %849 = vst [vmem:[%s206 + $0x18] sm:$0xff] %v840
      %850 = vst [vmem:[%s206 + $0x20] sm:$0xff] %v841
      %851 = vst [vmem:[%s206 + $0x28] sm:$0xff] %v842
      %852 = vst [vmem:[%s206 + $0x30] sm:$0xff] %v843
      %853 = vst [vmem:[%s206 + $0x38] sm:$0xff] %v844
      %854 = vst [vmem:[%s206 + $0x40] sm:$0xff] %v845
      %p855 = scmp.lt.s32.totalorder %s18, 1
      %s856 = scalar_select %p855, %s18, 1
      %p857 = scmp.lt.s32.totalorder %s19, 0
      %s858 = scalar_select %p857, %s19, 0
      %s859 = smul.addr %s858, 9
      %s860 = smul.addr %s856, 9
      %s861 = sadd.s32 %s859, %s860
      %s862 = smul.addr %s861, 8
      %s863 = scalar_lea.vmem %s3, %s862
      // Predicated region
      $region33: #{renderer_encoder.2} parent=31 // pred_check
        %p864 = pneg %p116
      $region34: #{renderer_encoder.2} parent=31 // pred_check_branch
        %866 = sbr.rel (%p864) target = $region36
      $region35: #{renderer_encoder.2} parent=31 // pred_region
        _
      $region36: #{renderer_encoder.2} parent=31 // pred_fallthru
        _
    $region32: #{renderer_encoder.2} parent=5 // pred_fallthru
      _
    %p867 = scmp.le.s32.totalorder 2, %s9
    // Predicated region
    $region37: #{renderer_encoder.2} parent=5 // pred_check
      %p868 = pneg %p867
    $region38: #{renderer_encoder.2} parent=5 // pred_check_branch
      %870 = sbr.rel (%p868) target = $region40
    $region39: #{renderer_encoder.2} parent=5 // pred_region
      %s871 = ssub.s32 %s9, 2
      // Predicated region
      $region41: #{renderer_encoder.2} parent=39 // pred_check
        %p872 = pneg %p122
      $region42: #{renderer_encoder.2} parent=39 // pred_check_branch
        %874 = sbr.rel (%p872) target = $region44
      $region43: #{renderer_encoder.2} parent=39 // pred_region
        %p875 = scmp.lt.s32.totalorder %s20, 1
        %s876 = scalar_select %p875, %s20, 1
        %p877 = scmp.lt.s32.totalorder %s21, 0
        %s878 = scalar_select %p877, %s21, 0
        %s879 = smul.addr %s878, 9
        %s880 = smul.addr %s876, 9
        %s881 = sadd.s32 %s879, %s880
        %s882 = smul.addr %s881, 8
        %s883 = scalar_lea.vmem %s3, %s882
      $region44: #{renderer_encoder.2} parent=39 // pred_fallthru
        _
    $region40: #{renderer_encoder.2} parent=5 // pred_fallthru
      _
  $region6: #{renderer_encoder.2} parent=0 // loop_footer
    %s13 = sadd.s32 1, %s9
  $region7: #{renderer_encoder.2} parent=0 // loop_footer_branch
    %8 = sbr.rel target = $region3
  $region8: #{renderer_encoder.2} parent=0 // loop_exit
    _

// kernel: renderer_encoder.3
$region0: #{renderer_encoder.3}
  #allocation0 [shape = 'u32[]', space=smem, size = 0x4, offset = 0x4, fixed_abs, tag = 'smem constant byte address 0x4 - core index']
  #allocation1 [shape = 'u32[144,128]{1,0:T(1,128)}', space=vmem, size = 0x12000, scoped, tag = 'internal scratch']
  %s0 = inlined_call_operand.vmem [shape: f32[2,1,30,256], index: 0, kind: input, shape index: {}]
  %s1 = inlined_call_operand.vmem [shape: f32[2,2,256,128], index: 1, kind: input, shape index: {}]
  %s2 = inlined_call_operand.vmem [shape: f32[1,128], index: 2, kind: input, shape index: {}]
  %s3 = inlined_call_operand.vmem [shape: f32[2,1,20,128], index: 3, kind: output, shape index: {}]
  %s4 = sld [smem:[#allocation0]]
  $region45: #{renderer_encoder.3} parent=0
    _
  %s6 = ssub.s32 1, %s4
  %s7 = scalar_select 0, %s6, %s4
  loop: start=0, step=1, limit=4
  $region2: #{renderer_encoder.3} parent=0 // loop_pre_header
    _
  $region3: #{renderer_encoder.3} parent=0 // loop_header
    %s9 = sphi 0, %s13
    %p10 = scmp.ge.s32.totalorder %s9, 4
    %s16 = sphi 0, %s28
    %s17 = sphi 0, %s24
    %s18 = sphi 0, %s16
    %s19 = sphi 0, %s17
    %s20 = sphi 0, %s18
    %s21 = sphi 0, %s19
    %s33 = sphi 0, %s35
    %s36 = sphi 0, %s33
    %s37 = sphi 0, %s36
    %s53 = sphi 0, %s37
    %s57 = sphi 0, %s57
    %s59 = sphi 0, %s57
    %s60 = sphi 0, %s59
    %s74 = sphi 0, %s60
    %s78 = sphi 0, %s78
    %s80 = sphi 0, %s78
    %s81 = sphi 0, %s80
    %s95 = sphi 0, %s81
    %s103 = sphi 0, %s105
    %s106 = sphi 0, %s103
    %s107 = sphi 0, %s106
    %s123 = sphi 0, %s107
  $region4: #{renderer_encoder.3} parent=0 // loop_header_branch
    %12 = sbr.rel (%p10) target = $region8
  $region5: #{renderer_encoder.3} parent=0 // loop_body
    %s14 = ssub.s32 %s9, 1
    %s15 = ssub.s32 %s9, 2
    %s22 = sadd.s32 1, %s17
    %p23 = scmp.ge.s32.totalorder %s22, 1
    %s24 = scalar_select %p23, 0, %s22
    %s25 = sadd.s32 1, %s16
    %s26 = scalar_select %p23, %s25, %s16
    %p27 = scmp.ge.s32.totalorder %s26, 2
    %s28 = scalar_select %p27, 0, %s26
    %s29 = ssub.s32 %s16, %s28
    %s30 = ssub.s32 %s17, %s24
    %s31 = sor.u32 %s29, %s30
    %p32 = scmp.eq.s32.totalorder %s31, 0
    %s34 = sadd.s32 %s33, 1
    %s35 = scalar_select %p32, %s33, %s34
    %p38 = pneg %p32
    %p39 = scmp.eq.s32.totalorder %s9, 1
    %p40 = por %p38, %p39
    %p41 = scmp.ne.s32.totalorder %s33, %s36
    %p42 = scmp.eq.s32.totalorder %s9, 0
    %p43 = por %p41, %p42
    %p44 = scmp.ne.s32.totalorder %s33, %s36
    %p45 = scmp.eq.s32.totalorder %s14, 1
    %p46 = por %p44, %p45
    %p47 = scmp.ne.s32.totalorder %s36, %s37
    %p48 = scmp.eq.s32.totalorder %s14, 0
    %p49 = por %p47, %p48
    %p50 = scmp.ne.s32.totalorder %s36, %s37
    %p51 = scmp.eq.s32.totalorder %s15, 1
    %p52 = por %p50, %p51
    %p54 = scmp.ne.s32.totalorder %s37, %s53
    %p55 = scmp.eq.s32.totalorder %s15, 0
    %p56 = por %p54, %p55
    %s58 = sadd.s32 %s57, 1
    %p61 = scmp.eq.s32.totalorder %s9, 1
    %p62 = scmp.ne.s32.totalorder %s57, %s59
    %p63 = scmp.eq.s32.totalorder %s9, 0
    %p64 = por %p62, %p63
    %p65 = scmp.ne.s32.totalorder %s57, %s59
    %p66 = scmp.eq.s32.totalorder %s14, 1
    %p67 = por %p65, %p66
    %p68 = scmp.ne.s32.totalorder %s59, %s60
    %p69 = scmp.eq.s32.totalorder %s14, 0
    %p70 = por %p68, %p69
    %p71 = scmp.ne.s32.totalorder %s59, %s60
    %p72 = scmp.eq.s32.totalorder %s15, 1
    %p73 = por %p71, %p72
    %p75 = scmp.ne.s32.totalorder %s60, %s74
    %p76 = scmp.eq.s32.totalorder %s15, 0
    %p77 = por %p75, %p76
    %s79 = sadd.s32 %s78, 1
    %p82 = scmp.eq.s32.totalorder %s9, 1
    %p83 = scmp.ne.s32.totalorder %s78, %s80
    %p84 = scmp.eq.s32.totalorder %s9, 0
    %p85 = por %p83, %p84
    %p86 = scmp.ne.s32.totalorder %s78, %s80
    %p87 = scmp.eq.s32.totalorder %s14, 1
    %p88 = por %p86, %p87
    %p89 = scmp.ne.s32.totalorder %s80, %s81
    %p90 = scmp.eq.s32.totalorder %s14, 0
    %p91 = por %p89, %p90
    %p92 = scmp.ne.s32.totalorder %s80, %s81
    %p93 = scmp.eq.s32.totalorder %s15, 1
    %p94 = por %p92, %p93
    %p96 = scmp.ne.s32.totalorder %s81, %s95
    %p97 = scmp.eq.s32.totalorder %s15, 0
    %p98 = por %p96, %p97
    %s99 = ssub.s32 %s16, %s28
    %s100 = ssub.s32 %s17, %s24
    %s101 = sor.u32 %s99, %s100
    %p102 = scmp.eq.s32.totalorder %s101, 0
    %s104 = sadd.s32 %s103, 1
    %s105 = scalar_select %p102, %s103, %s104
    %p108 = pneg %p102
    %p109 = scmp.eq.s32.totalorder %s9, 1
    %p110 = por %p108, %p109
    %p111 = scmp.ne.s32.totalorder %s103, %s106
    %p112 = scmp.eq.s32.totalorder %s9, 0
    %p113 = por %p111, %p112
    %p114 = scmp.ne.s32.totalorder %s103, %s106
    %p115 = scmp.eq.s32.totalorder %s14, 1
    %p116 = por %p114, %p115
    %p117 = scmp.ne.s32.totalorder %s106, %s107
    %p118 = scmp.eq.s32.totalorder %s14, 0
    %p119 = por %p117, %p118
    %p120 = scmp.ne.s32.totalorder %s106, %s107
    %p121 = scmp.eq.s32.totalorder %s15, 1
    %p122 = por %p120, %p121
    %p124 = scmp.ne.s32.totalorder %s107, %s123
    %p125 = scmp.eq.s32.totalorder %s15, 0
    %p126 = por %p124, %p125
    %p127 = scmp.le.s32.totalorder 1, %s9
    %p128 = scmp.lt.s32.totalorder %s9, 3
    %p129 = pnand %p127, %p128
    %p130 = pneg %p129
    // Predicated region
    $region9: #{renderer_encoder.3} parent=5 // pred_check
      _
    $region10: #{renderer_encoder.3} parent=5 // pred_check_branch
      %132 = sbr.rel (%p129) target = $region12
    $region11: #{renderer_encoder.3} parent=5 // pred_region
      %s133 = ssub.s32 %s9, 1
      // Predicated region
      $region13: #{renderer_encoder.3} parent=11 // pred_check
        %p134 = pneg %p70
      $region14: #{renderer_encoder.3} parent=11 // pred_check_branch
        %136 = sbr.rel (%p134) target = $region16
      $region15: #{renderer_encoder.3} parent=11 // pred_region
        _
      $region16: #{renderer_encoder.3} parent=11 // pred_fallthru
        _
      // Predicated region
      $region17: #{renderer_encoder.3} parent=11 // pred_check
        %p137 = pneg %p91
      $region18: #{renderer_encoder.3} parent=11 // pred_check_branch
        %139 = sbr.rel (%p137) target = $region20
      $region19: #{renderer_encoder.3} parent=11 // pred_region
        _
      $region20: #{renderer_encoder.3} parent=11 // pred_fallthru
        _
    $region12: #{renderer_encoder.3} parent=5 // pred_fallthru
      _
    %p140 = scmp.lt.s32.totalorder %s9, 2
    // Predicated region
    $region21: #{renderer_encoder.3} parent=5 // pred_check
      %p141 = pneg %p140
    $region22: #{renderer_encoder.3} parent=5 // pred_check_branch
      %143 = sbr.rel (%p141) target = $region24
    $region23: #{renderer_encoder.3} parent=5 // pred_region
      // Predicated region
      $region25: #{renderer_encoder.3} parent=23 // pred_check
        %p144 = pneg %p43
      $region26: #{renderer_encoder.3} parent=23 // pred_check_branch
        %146 = sbr.rel (%p144) target = $region28
      $region27: #{renderer_encoder.3} parent=23 // pred_region
        %p147 = scmp.lt.s32.totalorder %s16, 1
        %s148 = scalar_select %p147, %s16, 1
        %p149 = scmp.lt.s32.totalorder %s17, 0
        %s150 = scalar_select %p149, %s17, 0
        %s151 = smul.addr %s150, 8
        %s152 = smul.addr %s148, 8
        %s153 = sadd.s32 %s151, %s152
        %s154 = smul.addr %s153, 8
        %s155 = scalar_lea.vmem %s0, %s154
      $region28: #{renderer_encoder.3} parent=23 // pred_fallthru
        _
    $region24: #{renderer_encoder.3} parent=5 // pred_fallthru
      _
    %p156 = scmp.le.s32.totalorder 1, %s9
    %p157 = scmp.lt.s32.totalorder %s9, 3
    %p158 = pnand %p156, %p157
    %p159 = pneg %p158
    // Predicated region
    $region29: #{renderer_encoder.3} parent=5 // pred_check
      _
    $region30: #{renderer_encoder.3} parent=5 // pred_check_branch
      %161 = sbr.rel (%p158) target = $region32
    $region31: #{renderer_encoder.3} parent=5 // pred_region
      %s162 = ssub.s32 %s9, 1
      %p163 = scmp.lt.s32.totalorder %s18, 1
      %s164 = scalar_select %p163, %s18, 1
      %p165 = scmp.lt.s32.totalorder %s19, 0
      %s166 = scalar_select %p165, %s19, 0
      %s167 = smul.addr %s166, 8
      %s168 = smul.addr %s164, 8
      %s169 = sadd.s32 %s167, %s168
      %s170 = smul.addr %s169, 8
      %s171 = scalar_lea.vmem %s0, %s170
      %p172 = pneg %p49
      %p173 = pneg %p46
      %p174 = pneg %p70
      %p175 = pneg %p67
      %p176 = pneg %p91
      %p177 = pneg %p88
      %p178 = pneg %p119
      %p179 = pneg %p116
      %p180 = scmp.lt.s32.totalorder %s18, 1
      %s181 = scalar_select %p180, %s18, 1
      %p182 = scmp.lt.s32.totalorder %s19, 0
      %s183 = scalar_select %p182, %s19, 0
      %s184 = smul.addr %s183, 3
      %s185 = smul.addr %s181, 3
      %s186 = sadd.s32 %s184, %s185
      %s187 = smul.addr %s186, 8
      %s188 = scalar_lea.vmem %s3, %s187
      %p189 = scmp.lt.s32.totalorder %s18, 1
      %s190 = scalar_select %p189, %s18, 1
      %p191 = scmp.lt.s32.totalorder %s19, 0
      %s192 = scalar_select %p191, %s19, 0
      %s193 = smul.addr %s192, 8
      %s194 = smul.addr %s190, 8
      %s195 = sadd.s32 %s193, %s194
      %s196 = smul.addr %s195, 8
      %s197 = scalar_lea.vmem %s0, %s196
      %p198 = scmp.lt.s32.totalorder %s18, 1
      %s199 = scalar_select %p198, %s18, 1
      %p200 = scmp.lt.s32.totalorder %s19, 0
      %s201 = scalar_select %p200, %s19, 0
      %s202 = smul.addr %s201, 3
      %s203 = smul.addr %s199, 3
      %s204 = sadd.s32 %s202, %s203
      %s205 = smul.addr %s204, 8
      %s206 = scalar_lea.vmem %s3, %s205
      %v207 = vld [vmem:[%s197] sm:$0xff]
      %v208 = vld [vmem:[%s197 + $0x8] sm:$0xff]
      %v209 = vld [vmem:[%s197 + $0x10] sm:$0xff]
      %v210 = vld [vmem:[%s197 + $0x18] sm:$0xff]
      %v211 = vld [vmem:[%s197 + $0x20] sm:$0xf]
      %v212 = vld [vmem:[%s197 + $0x28] sm:$0xf]
      %v213 = vld [vmem:[%s1] sm:$0xff]
      %v214 = vld [vmem:[%s1 + $0x8] sm:$0xff]
      %v215 = vld [vmem:[%s1 + $0x10] sm:$0xff]
      %v216 = vld [vmem:[%s1 + $0x18] sm:$0xff]
      %v217 = vld [vmem:[%s1 + $0x20] sm:$0xff]
      %v218 = vld [vmem:[%s1 + $0x28] sm:$0xff]
      %v219 = vld [vmem:[%s1 + $0x30] sm:$0xff]
      %v220 = vld [vmem:[%s1 + $0x38] sm:$0xff]
      %v221 = vld [vmem:[%s1 + $0x40] sm:$0xff]
      %v222 = vld [vmem:[%s1 + $0x48] sm:$0xff]
      %v223 = vld [vmem:[%s1 + $0x50] sm:$0xff]
      %v224 = vld [vmem:[%s1 + $0x58] sm:$0xff]
      %v225 = vld [vmem:[%s1 + $0x60] sm:$0xff]
      %v226 = vld [vmem:[%s1 + $0x68] sm:$0xff]
      %v227 = vld [vmem:[%s1 + $0x70] sm:$0xff]
      %v228 = vld [vmem:[%s1 + $0x78] sm:$0xff]
      %v229 = vld [vmem:[%s1 + $0x80] sm:$0xff]
      %v230 = vld [vmem:[%s1 + $0x88] sm:$0xff]
      %v231 = vld [vmem:[%s1 + $0x90] sm:$0xff]
      %v232 = vld [vmem:[%s1 + $0x98] sm:$0xff]
      %v233 = vld [vmem:[%s1 + $0xa0] sm:$0xff]
      %v234 = vld [vmem:[%s1 + $0xa8] sm:$0xff]
      %v235 = vld [vmem:[%s1 + $0xb0] sm:$0xff]
      %v236 = vld [vmem:[%s1 + $0xb8] sm:$0xff]
      %v237 = vld [vmem:[%s1 + $0xc0] sm:$0xff]
      %v238 = vld [vmem:[%s1 + $0xc8] sm:$0xff]
      %v239 = vld [vmem:[%s1 + $0xd0] sm:$0xff]
      %v240 = vld [vmem:[%s1 + $0xd8] sm:$0xff]
      %v241 = vld [vmem:[%s1 + $0xe0] sm:$0xff]
      %v242 = vld [vmem:[%s1 + $0xe8] sm:$0xff]
      %v243 = vld [vmem:[%s1 + $0xf0] sm:$0xff]
      %v244 = vld [vmem:[%s1 + $0xf8] sm:$0xff]
      %v245 = vld [vmem:[%s197] sm:$0xfe]
      %v246 = vld [vmem:[%s197 + $0x8] sm:$0xfe]
      %v247 = vld [vmem:[%s197 + $0x20] sm:$0x1f]
      %v248 = vld [vmem:[%s197 + $0x28] sm:$0x1f]
      %s249 = scalar_lea.vmem %s1, 256
      %v250 = vld [vmem:[%s249] sm:$0xff]
      %v251 = vld [vmem:[%s249 + $0x8] sm:$0xff]
      %v252 = vld [vmem:[%s249 + $0x10] sm:$0xff]
      %v253 = vld [vmem:[%s249 + $0x18] sm:$0xff]
      %v254 = vld [vmem:[%s249 + $0x20] sm:$0xff]
      %v255 = vld [vmem:[%s249 + $0x28] sm:$0xff]
      %v256 = vld [vmem:[%s249 + $0x30] sm:$0xff]
      %v257 = vld [vmem:[%s249 + $0x38] sm:$0xff]
      %v258 = vld [vmem:[%s249 + $0x40] sm:$0xff]
      %v259 = vld [vmem:[%s249 + $0x48] sm:$0xff]
      %v260 = vld [vmem:[%s249 + $0x50] sm:$0xff]
      %v261 = vld [vmem:[%s249 + $0x58] sm:$0xff]
      %v262 = vld [vmem:[%s249 + $0x60] sm:$0xff]
      %v263 = vld [vmem:[%s249 + $0x68] sm:$0xff]
      %v264 = vld [vmem:[%s249 + $0x70] sm:$0xff]
      %v265 = vld [vmem:[%s249 + $0x78] sm:$0xff]
      %v266 = vld [vmem:[%s249 + $0x80] sm:$0xff]
      %v267 = vld [vmem:[%s249 + $0x88] sm:$0xff]
      %v268 = vld [vmem:[%s249 + $0x90] sm:$0xff]
      %v269 = vld [vmem:[%s249 + $0x98] sm:$0xff]
      %v270 = vld [vmem:[%s249 + $0xa0] sm:$0xff]
      %v271 = vld [vmem:[%s249 + $0xa8] sm:$0xff]
      %v272 = vld [vmem:[%s249 + $0xb0] sm:$0xff]
      %v273 = vld [vmem:[%s249 + $0xb8] sm:$0xff]
      %v274 = vld [vmem:[%s249 + $0xc0] sm:$0xff]
      %v275 = vld [vmem:[%s249 + $0xc8] sm:$0xff]
      %v276 = vld [vmem:[%s249 + $0xd0] sm:$0xff]
      %v277 = vld [vmem:[%s249 + $0xd8] sm:$0xff]
      %v278 = vld [vmem:[%s249 + $0xe0] sm:$0xff]
      %v279 = vld [vmem:[%s249 + $0xe8] sm:$0xff]
      %v280 = vld [vmem:[%s249 + $0xf0] sm:$0xff]
      %v281 = vld [vmem:[%s249 + $0xf8] sm:$0xff]
      %vm288 = vcmask 1046528
      %v289 = vrot.slane %v245, 1
      %v290 = vrot.slane %v209, 1
      %v291 = vsel %vm288, %v289, %v290
      %v292 = vrot.slane %v246, 1
      %v293 = vrot.slane %v210, 1
      %v294 = vsel %vm288, %v292, %v293
      %v295 = vrot.slane %v247, 1
      %v296 = vsel %vm288, %v290, %v295
      %v297 = vrot.slane %v248, 1
      %v298 = vsel %vm288, %v293, %v297
      %305 = vmatprep.subr.mxu0 0.0
      %306 = vmatpush1.msra.mxu0 %v250
      %307 = vmatprep.subr.mxu0 0.0
      %308 = vmatpush1.msra.mxu0 %v251
      %309 = vmatprep.subr.mxu0 0.0
      %310 = vmatpush1.msra.mxu0 %v252
      %311 = vmatprep.subr.mxu0 0.0
      %312 = vmatpush1.msra.mxu0 %v253
      %313 = vmatprep.subr.mxu0 0.0
      %314 = vmatpush1.msra.mxu0 %v254
      %315 = vmatprep.subr.mxu0 0.0
      %316 = vmatpush1.msra.mxu0 %v255
      %317 = vmatprep.subr.mxu0 0.0
      %318 = vmatpush1.msra.mxu0 %v256
      %319 = vmatprep.subr.mxu0 0.0
      %320 = vmatpush1.msra.mxu0 %v257
      %321 = vmatprep.subr.mxu0 0.0
      %322 = vmatpush1.msra.mxu0 %v258
      %323 = vmatprep.subr.mxu0 0.0
      %324 = vmatpush1.msra.mxu0 %v259
      %325 = vmatprep.subr.mxu0 0.0
      %326 = vmatpush1.msra.mxu0 %v260
      %327 = vmatprep.subr.mxu0 0.0
      %328 = vmatpush1.msra.mxu0 %v261
      %329 = vmatprep.subr.mxu0 0.0
      %330 = vmatpush1.msra.mxu0 %v262
      %331 = vmatprep.subr.mxu0 0.0
      %332 = vmatpush1.msra.mxu0 %v263
      %333 = vmatprep.subr.mxu0 0.0
      %334 = vmatpush1.msra.mxu0 %v264
      %335 = vmatprep.subr.mxu0 0.0
      %336 = vmatpush1.msra.mxu0 %v265
      %337 = vmatprep.subr.mxu0 0.0
      %338 = vmatpush1.msra.mxu0 %v266
      %339 = vmatprep.subr.mxu0 0.0
      %340 = vmatpush1.msra.mxu0 %v267
      %341 = vmatprep.subr.mxu0 0.0
      %342 = vmatpush1.msra.mxu0 %v268
      %343 = vmatprep.subr.mxu0 0.0
      %344 = vmatpush1.msra.mxu0 %v269
      %345 = vmatprep.subr.mxu0 0.0
      %346 = vmatpush1.msra.mxu0 %v270
      %347 = vmatprep.subr.mxu0 0.0
      %348 = vmatpush1.msra.mxu0 %v271
      %349 = vmatprep.subr.mxu0 0.0
      %350 = vmatpush1.msra.mxu0 %v272
      %351 = vmatprep.subr.mxu0 0.0
      %352 = vmatpush1.msra.mxu0 %v273
      %353 = vmatprep.subr.mxu0 0.0
      %354 = vmatpush1.msra.mxu0 %v274
      %355 = vmatprep.subr.mxu0 0.0
      %356 = vmatpush1.msra.mxu0 %v275
      %357 = vmatprep.subr.mxu0 0.0
      %358 = vmatpush1.msra.mxu0 %v276
      %359 = vmatprep.subr.mxu0 0.0
      %360 = vmatpush1.msra.mxu0 %v277
      %361 = vmatprep.subr.mxu0 0.0
      %362 = vmatpush1.msra.mxu0 %v278
      %363 = vmatprep.subr.mxu0 0.0
      %364 = vmatpush1.msra.mxu0 %v279
      %365 = vmatprep.subr.mxu0 0.0
      %366 = vmatpush1.msra.mxu0 %v280
      %367 = vmatprep.subr.mxu0 0.0
      %368 = vmatpush1.msra.mxu0 %v281
      %369 = vmatprep.mubr.f32.mxu0 %v294
      %370 = vmatmul.mubr.f32.gmra.mrb[0].mxu0 %v291
      %v371 = vpop.f32.mrb[0].mxu0
      %v372 = vadd.f32 0.0, %v371
      %v373 = vpop.f32.mrb[0].mxu0
      %374 = vmatprep.mubr.f32.mxu0 %v298
      %375 = vmatmul.mubr.f32.gmra.mrb[0].mxu0 %v296
      %v376 = vpop.f32.mrb[0].mxu0
      %v377 = vadd.f32 0.0, %v376
      %v378 = vpop.f32.mrb[0].mxu0
      %379 = vmatprep.mubr.f32.mxu0 %v297
      %380 = vmatmul.mubr.f32.gmra.mrb[0].mxu0 %v295
      %v381 = vpop.f32.mrb[0].mxu0
      %v382 = vadd.f32 0.0, %v381
      %v383 = vpop.f32.mrb[0].mxu0
      %384 = vdwg.mxu0
      %385 = vmatprep.subr.mxu0 0.0
      %386 = vmatpush1.msra.mxu0 %v213
      %387 = vmatprep.subr.mxu0 0.0
      %388 = vmatpush1.msra.mxu0 %v214
      %389 = vmatprep.subr.mxu0 0.0
      %390 = vmatpush1.msra.mxu0 %v215
      %391 = vmatprep.subr.mxu0 0.0
      %392 = vmatpush1.msra.mxu0 %v216
      %393 = vmatprep.subr.mxu0 0.0
      %394 = vmatpush1.msra.mxu0 %v217
      %395 = vmatprep.subr.mxu0 0.0
      %396 = vmatpush1.msra.mxu0 %v218
      %397 = vmatprep.subr.mxu0 0.0
      %398 = vmatpush1.msra.mxu0 %v219
      %399 = vmatprep.subr.mxu0 0.0
      %400 = vmatpush1.msra.mxu0 %v220
      %401 = vmatprep.subr.mxu0 0.0
      %402 = vmatpush1.msra.mxu0 %v221
      %403 = vmatprep.subr.mxu0 0.0
      %404 = vmatpush1.msra.mxu0 %v222
      %405 = vmatprep.subr.mxu0 0.0
      %406 = vmatpush1.msra.mxu0 %v223
      %407 = vmatprep.subr.mxu0 0.0
      %408 = vmatpush1.msra.mxu0 %v224
      %409 = vmatprep.subr.mxu0 0.0
      %410 = vmatpush1.msra.mxu0 %v225
      %411 = vmatprep.subr.mxu0 0.0
      %412 = vmatpush1.msra.mxu0 %v226
      %413 = vmatprep.subr.mxu0 0.0
      %414 = vmatpush1.msra.mxu0 %v227
      %415 = vmatprep.subr.mxu0 0.0
      %416 = vmatpush1.msra.mxu0 %v228
      %417 = vmatprep.subr.mxu0 0.0
      %418 = vmatpush1.msra.mxu0 %v229
      %419 = vmatprep.subr.mxu0 0.0
      %420 = vmatpush1.msra.mxu0 %v230
      %421 = vmatprep.subr.mxu0 0.0
      %422 = vmatpush1.msra.mxu0 %v231
      %423 = vmatprep.subr.mxu0 0.0
      %424 = vmatpush1.msra.mxu0 %v232
      %425 = vmatprep.subr.mxu0 0.0
      %426 = vmatpush1.msra.mxu0 %v233
      %427 = vmatprep.subr.mxu0 0.0
      %428 = vmatpush1.msra.mxu0 %v234
      %429 = vmatprep.subr.mxu0 0.0
      %430 = vmatpush1.msra.mxu0 %v235
      %431 = vmatprep.subr.mxu0 0.0
      %432 = vmatpush1.msra.mxu0 %v236
      %433 = vmatprep.subr.mxu0 0.0
      %434 = vmatpush1.msra.mxu0 %v237
      %435 = vmatprep.subr.mxu0 0.0
      %436 = vmatpush1.msra.mxu0 %v238
      %437 = vmatprep.subr.mxu0 0.0
      %438 = vmatpush1.msra.mxu0 %v239
      %439 = vmatprep.subr.mxu0 0.0
      %440 = vmatpush1.msra.mxu0 %v240
      %441 = vmatprep.subr.mxu0 0.0
      %442 = vmatpush1.msra.mxu0 %v241
      %443 = vmatprep.subr.mxu0 0.0
      %444 = vmatpush1.msra.mxu0 %v242
      %445 = vmatprep.subr.mxu0 0.0
      %446 = vmatpush1.msra.mxu0 %v243
      %447 = vmatprep.subr.mxu0 0.0
      %448 = vmatpush1.msra.mxu0 %v244
      %449 = vmatprep.mubr.f32.mxu0 %v208
      %450 = vmatmul.mubr.f32.gmra.mrb[0].mxu0 %v207
      %v451 = vpop.f32.mrb[0].mxu0
      %v452 = vadd.f32 %v372, %v451
      %v453 = vpop.f32.mrb[0].mxu0
      %454 = vmatprep.mubr.f32.mxu0 %v210
      %455 = vmatmul.mubr.f32.gmra.mrb[0].mxu0 %v209
      %v456 = vpop.f32.mrb[0].mxu0
      %v457 = vadd.f32 %v377, %v456
      %v458 = vpop.f32.mrb[0].mxu0
      %459 = vmatprep.mubr.f32.mxu0 %v212
      %460 = vmatmul.mubr.f32.gmra.mrb[0].mxu0 %v211
      %v461 = vpop.f32.mrb[0].mxu0
      %v462 = vadd.f32 %v382, %v461
      %v463 = vpop.f32.mrb[0].mxu0
      %464 = vdwg.mxu0
      %v465 = vld [vmem:[%s197] sm:$0xe0]
      %v466 = vld [vmem:[%s197 + $0x8] sm:$0xe0]
      %v467 = vld [vmem:[%s197 + $0x10] sm:$0xff]
      %v468 = vld [vmem:[%s197 + $0x18] sm:$0xff]
      %v469 = vld [vmem:[%s197 + $0x20] sm:$0xff]
      %v470 = vld [vmem:[%s197 + $0x28] sm:$0xff]
      %v471 = vld [vmem:[%s197 + $0x30] sm:$0x1]
      %v472 = vld [vmem:[%s197 + $0x38] sm:$0x1]
      %s473 = scalar_lea.vmem %s1, 512
      %v474 = vld [vmem:[%s473] sm:$0xff]
      %v475 = vld [vmem:[%s473 + $0x8] sm:$0xff]
      %v476 = vld [vmem:[%s473 + $0x10] sm:$0xff]
      %v477 = vld [vmem:[%s473 + $0x18] sm:$0xff]
      %v478 = vld [vmem:[%s473 + $0x20] sm:$0xff]
      %v479 = vld [vmem:[%s473 + $0x28] sm:$0xff]
      %v480 = vld [vmem:[%s473 + $0x30] sm:$0xff]
      %v481 = vld [vmem:[%s473 + $0x38] sm:$0xff]
      %v482 = vld [vmem:[%s473 + $0x40] sm:$0xff]
      %v483 = vld [vmem:[%s473 + $0x48] sm:$0xff]
      %v484 = vld [vmem:[%s473 + $0x50] sm:$0xff]
      %v485 = vld [vmem:[%s473 + $0x58] sm:$0xff]
      %v486 = vld [vmem:[%s473 + $0x60] sm:$0xff]
      %v487 = vld [vmem:[%s473 + $0x68] sm:$0xff]
      %v488 = vld [vmem:[%s473 + $0x70] sm:$0xff]
      %v489 = vld [vmem:[%s473 + $0x78] sm:$0xff]
      %v490 = vld [vmem:[%s473 + $0x80] sm:$0xff]
      %v491 = vld [vmem:[%s473 + $0x88] sm:$0xff]
      %v492 = vld [vmem:[%s473 + $0x90] sm:$0xff]
      %v493 = vld [vmem:[%s473 + $0x98] sm:$0xff]
      %v494 = vld [vmem:[%s473 + $0xa0] sm:$0xff]
      %v495 = vld [vmem:[%s473 + $0xa8] sm:$0xff]
      %v496 = vld [vmem:[%s473 + $0xb0] sm:$0xff]
      %v497 = vld [vmem:[%s473 + $0xb8] sm:$0xff]
      %v498 = vld [vmem:[%s473 + $0xc0] sm:$0xff]
      %v499 = vld [vmem:[%s473 + $0xc8] sm:$0xff]
      %v500 = vld [vmem:[%s473 + $0xd0] sm:$0xff]
      %v501 = vld [vmem:[%s473 + $0xd8] sm:$0xff]
      %v502 = vld [vmem:[%s473 + $0xe0] sm:$0xff]
      %v503 = vld [vmem:[%s473 + $0xe8] sm:$0xff]
      %v504 = vld [vmem:[%s473 + $0xf0] sm:$0xff]
      %v505 = vld [vmem:[%s473 + $0xf8] sm:$0xff]
      %vm514 = vcmask 1042432
      %v515 = vrot.slane %v465, 5
      %v516 = vrot.slane %v467, 5
      %v517 = vsel %vm514, %v515, %v516
      %v518 = vrot.slane %v466, 5
      %v519 = vrot.slane %v468, 5
      %v520 = vsel %vm514, %v518, %v519
      %v521 = vrot.slane %v469, 5
      %v522 = vsel %vm514, %v516, %v521
      %v523 = vrot.slane %v470, 5
      %v524 = vsel %vm514, %v519, %v523
      %v525 = vrot.slane %v471, 5
      %v526 = vsel %vm514, %v521, %v525
      %v527 = vrot.slane %v472, 5
      %v528 = vsel %vm514, %v523, %v527
      %535 = vmatprep.subr.mxu0 0.0
      %536 = vmatpush1.msra.mxu0 %v474
      %537 = vmatprep.subr.mxu0 0.0
      %538 = vmatpush1.msra.mxu0 %v475
      %539 = vmatprep.subr.mxu0 0.0
      %540 = vmatpush1.msra.mxu0 %v476
      %541 = vmatprep.subr.mxu0 0.0
      %542 = vmatpush1.msra.mxu0 %v477
      %543 = vmatprep.subr.mxu0 0.0
      %544 = vmatpush1.msra.mxu0 %v478
      %545 = vmatprep.subr.mxu0 0.0
      %546 = vmatpush1.msra.mxu0 %v479
      %547 = vmatprep.subr.mxu0 0.0
      %548 = vmatpush1.msra.mxu0 %v480
      %549 = vmatprep.subr.mxu0 0.0
      %550 = vmatpush1.msra.mxu0 %v481
      %551 = vmatprep.subr.mxu0 0.0
      %552 = vmatpush1.msra.mxu0 %v482
      %553 = vmatprep.subr.mxu0 0.0
      %554 = vmatpush1.msra.mxu0 %v483
      %555 = vmatprep.subr.mxu0 0.0
      %556 = vmatpush1.msra.mxu0 %v484
      %557 = vmatprep.subr.mxu0 0.0
      %558 = vmatpush1.msra.mxu0 %v485
      %559 = vmatprep.subr.mxu0 0.0
      %560 = vmatpush1.msra.mxu0 %v486
      %561 = vmatprep.subr.mxu0 0.0
      %562 = vmatpush1.msra.mxu0 %v487
      %563 = vmatprep.subr.mxu0 0.0
      %564 = vmatpush1.msra.mxu0 %v488
      %565 = vmatprep.subr.mxu0 0.0
      %566 = vmatpush1.msra.mxu0 %v489
      %567 = vmatprep.subr.mxu0 0.0
      %568 = vmatpush1.msra.mxu0 %v490
      %569 = vmatprep.subr.mxu0 0.0
      %570 = vmatpush1.msra.mxu0 %v491
      %571 = vmatprep.subr.mxu0 0.0
      %572 = vmatpush1.msra.mxu0 %v492
      %573 = vmatprep.subr.mxu0 0.0
      %574 = vmatpush1.msra.mxu0 %v493
      %575 = vmatprep.subr.mxu0 0.0
      %576 = vmatpush1.msra.mxu0 %v494
      %577 = vmatprep.subr.mxu0 0.0
      %578 = vmatpush1.msra.mxu0 %v495
      %579 = vmatprep.subr.mxu0 0.0
      %580 = vmatpush1.msra.mxu0 %v496
      %581 = vmatprep.subr.mxu0 0.0
      %582 = vmatpush1.msra.mxu0 %v497
      %583 = vmatprep.subr.mxu0 0.0
      %584 = vmatpush1.msra.mxu0 %v498
      %585 = vmatprep.subr.mxu0 0.0
      %586 = vmatpush1.msra.mxu0 %v499
      %587 = vmatprep.subr.mxu0 0.0
      %588 = vmatpush1.msra.mxu0 %v500
      %589 = vmatprep.subr.mxu0 0.0
      %590 = vmatpush1.msra.mxu0 %v501
      %591 = vmatprep.subr.mxu0 0.0
      %592 = vmatpush1.msra.mxu0 %v502
      %593 = vmatprep.subr.mxu0 0.0
      %594 = vmatpush1.msra.mxu0 %v503
      %595 = vmatprep.subr.mxu0 0.0
      %596 = vmatpush1.msra.mxu0 %v504
      %597 = vmatprep.subr.mxu0 0.0
      %598 = vmatpush1.msra.mxu0 %v505
      %599 = vmatprep.mubr.f32.mxu0 %v520
      %600 = vmatmul.mubr.f32.gmra.mrb[0].mxu0 %v517
      %v601 = vpop.f32.mrb[0].mxu0
      %v602 = vadd.f32 0.0, %v601
      %v603 = vpop.f32.mrb[0].mxu0
      %604 = vmatprep.mubr.f32.mxu0 %v524
      %605 = vmatmul.mubr.f32.gmra.mrb[0].mxu0 %v522
      %v606 = vpop.f32.mrb[0].mxu0
      %v607 = vadd.f32 0.0, %v606
      %v608 = vpop.f32.mrb[0].mxu0
      %609 = vmatprep.mubr.f32.mxu0 %v528
      %610 = vmatmul.mubr.f32.gmra.mrb[0].mxu0 %v526
      %v611 = vpop.f32.mrb[0].mxu0
      %v612 = vadd.f32 0.0, %v611
      %v613 = vpop.f32.mrb[0].mxu0
      %614 = vdwg.mxu0
      %v615 = vadd.f32 %v452, %v602
      %v616 = vadd.f32 %v457, %v607
      %v617 = vadd.f32 %v462, %v612
      %v618 = vld [vmem:[%s197] sm:$0xc0]
      %v619 = vld [vmem:[%s197 + $0x8] sm:$0xc0]
      %v620 = vld [vmem:[%s197 + $0x30] sm:$0x3]
      %v621 = vld [vmem:[%s197 + $0x38] sm:$0x3]
      %s622 = scalar_lea.vmem %s1, 768
      %v623 = vld [vmem:[%s622] sm:$0xff]
      %v624 = vld [vmem:[%s622 + $0x8] sm:$0xff]
      %v625 = vld [vmem:[%s622 + $0x10] sm:$0xff]
      %v626 = vld [vmem:[%s622 + $0x18] sm:$0xff]
      %v627 = vld [vmem:[%s622 + $0x20] sm:$0xff]
      %v628 = vld [vmem:[%s622 + $0x28] sm:$0xff]
      %v629 = vld [vmem:[%s622 + $0x30] sm:$0xff]
      %v630 = vld [vmem:[%s622 + $0x38] sm:$0xff]
      %v631 = vld [vmem:[%s622 + $0x40] sm:$0xff]
      %v632 = vld [vmem:[%s622 + $0x48] sm:$0xff]
      %v633 = vld [vmem:[%s622 + $0x50] sm:$0xff]
      %v634 = vld [vmem:[%s622 + $0x58] sm:$0xff]
      %v635 = vld [vmem:[%s622 + $0x60] sm:$0xff]
      %v636 = vld [vmem:[%s622 + $0x68] sm:$0xff]
      %v637 = vld [vmem:[%s622 + $0x70] sm:$0xff]
      %v638 = vld [vmem:[%s622 + $0x78] sm:$0xff]
      %v639 = vld [vmem:[%s622 + $0x80] sm:$0xff]
      %v640 = vld [vmem:[%s622 + $0x88] sm:$0xff]
      %v641 = vld [vmem:[%s622 + $0x90] sm:$0xff]
      %v642 = vld [vmem:[%s622 + $0x98] sm:$0xff]
      %v643 = vld [vmem:[%s622 + $0xa0] sm:$0xff]
      %v644 = vld [vmem:[%s622 + $0xa8] sm:$0xff]
      %v645 = vld [vmem:[%s622 + $0xb0] sm:$0xff]
      %v646 = vld [vmem:[%s622 + $0xb8] sm:$0xff]
      %v647 = vld [vmem:[%s622 + $0xc0] sm:$0xff]
      %v648 = vld [vmem:[%s622 + $0xc8] sm:$0xff]
      %v649 = vld [vmem:[%s622 + $0xd0] sm:$0xff]
      %v650 = vld [vmem:[%s622 + $0xd8] sm:$0xff]
      %v651 = vld [vmem:[%s622 + $0xe0] sm:$0xff]
      %v652 = vld [vmem:[%s622 + $0xe8] sm:$0xff]
      %v653 = vld [vmem:[%s622 + $0xf0] sm:$0xff]
      %v654 = vld [vmem:[%s622 + $0xf8] sm:$0xff]
      %vm659 = vcmask 1041408
      %v660 = vrot.slane %v618, 6
      %v661 = vrot.slane %v467, 6
      %v662 = vsel %vm659, %v660, %v661
      %v663 = vrot.slane %v619, 6
      %v664 = vrot.slane %v468, 6
      %v665 = vsel %vm659, %v663, %v664
      %v666 = vrot.slane %v469, 6
      %v667 = vsel %vm659, %v661, %v666
      %v668 = vrot.slane %v470, 6
      %v669 = vsel %vm659, %v664, %v668
      %v670 = vrot.slane %v620, 6
      %v671 = vsel %vm659, %v666, %v670
      %v672 = vrot.slane %v621, 6
      %v673 = vsel %vm659, %v668, %v672
      %680 = vmatprep.subr.mxu0 0.0
      %681 = vmatpush1.msra.mxu0 %v623
      %682 = vmatprep.subr.mxu0 0.0
      %683 = vmatpush1.msra.mxu0 %v624
      %684 = vmatprep.subr.mxu0 0.0
      %685 = vmatpush1.msra.mxu0 %v625
      %686 = vmatprep.subr.mxu0 0.0
      %687 = vmatpush1.msra.mxu0 %v626
      %688 = vmatprep.subr.mxu0 0.0
      %689 = vmatpush1.msra.mxu0 %v627
      %690 = vmatprep.subr.mxu0 0.0
      %691 = vmatpush1.msra.mxu0 %v628
      %692 = vmatprep.subr.mxu0 0.0
      %693 = vmatpush1.msra.mxu0 %v629
      %694 = vmatprep.subr.mxu0 0.0
      %695 = vmatpush1.msra.mxu0 %v630
      %696 = vmatprep.subr.mxu0 0.0
      %697 = vmatpush1.msra.mxu0 %v631
      %698 = vmatprep.subr.mxu0 0.0
      %699 = vmatpush1.msra.mxu0 %v632
      %700 = vmatprep.subr.mxu0 0.0
      %701 = vmatpush1.msra.mxu0 %v633
      %702 = vmatprep.subr.mxu0 0.0
      %703 = vmatpush1.msra.mxu0 %v634
      %704 = vmatprep.subr.mxu0 0.0
      %705 = vmatpush1.msra.mxu0 %v635
      %706 = vmatprep.subr.mxu0 0.0
      %707 = vmatpush1.msra.mxu0 %v636
      %708 = vmatprep.subr.mxu0 0.0
      %709 = vmatpush1.msra.mxu0 %v637
      %710 = vmatprep.subr.mxu0 0.0
      %711 = vmatpush1.msra.mxu0 %v638
      %712 = vmatprep.subr.mxu0 0.0
      %713 = vmatpush1.msra.mxu0 %v639
      %714 = vmatprep.subr.mxu0 0.0
      %715 = vmatpush1.msra.mxu0 %v640
      %716 = vmatprep.subr.mxu0 0.0
      %717 = vmatpush1.msra.mxu0 %v641
      %718 = vmatprep.subr.mxu0 0.0
      %719 = vmatpush1.msra.mxu0 %v642
      %720 = vmatprep.subr.mxu0 0.0
      %721 = vmatpush1.msra.mxu0 %v643
      %722 = vmatprep.subr.mxu0 0.0
      %723 = vmatpush1.msra.mxu0 %v644
      %724 = vmatprep.subr.mxu0 0.0
      %725 = vmatpush1.msra.mxu0 %v645
      %726 = vmatprep.subr.mxu0 0.0
      %727 = vmatpush1.msra.mxu0 %v646
      %728 = vmatprep.subr.mxu0 0.0
      %729 = vmatpush1.msra.mxu0 %v647
      %730 = vmatprep.subr.mxu0 0.0
      %731 = vmatpush1.msra.mxu0 %v648
      %732 = vmatprep.subr.mxu0 0.0
      %733 = vmatpush1.msra.mxu0 %v649
      %734 = vmatprep.subr.mxu0 0.0
      %735 = vmatpush1.msra.mxu0 %v650
      %736 = vmatprep.subr.mxu0 0.0
      %737 = vmatpush1.msra.mxu0 %v651
      %738 = vmatprep.subr.mxu0 0.0
      %739 = vmatpush1.msra.mxu0 %v652
      %740 = vmatprep.subr.mxu0 0.0
      %741 = vmatpush1.msra.mxu0 %v653
      %742 = vmatprep.subr.mxu0 0.0
      %743 = vmatpush1.msra.mxu0 %v654
      %744 = vmatprep.mubr.f32.mxu0 %v665
      %745 = vmatmul.mubr.f32.gmra.mrb[0].mxu0 %v662
      %v746 = vpop.f32.mrb[0].mxu0
      %v747 = vadd.f32 0.0, %v746
      %v748 = vpop.f32.mrb[0].mxu0
      %749 = vmatprep.mubr.f32.mxu0 %v669
      %750 = vmatmul.mubr.f32.gmra.mrb[0].mxu0 %v667
      %v751 = vpop.f32.mrb[0].mxu0
      %v752 = vadd.f32 0.0, %v751
      %v753 = vpop.f32.mrb[0].mxu0
      %754 = vmatprep.mubr.f32.mxu0 %v673
      %755 = vmatmul.mubr.f32.gmra.mrb[0].mxu0 %v671
      %v756 = vpop.f32.mrb[0].mxu0
      %v757 = vadd.f32 0.0, %v756
      %v758 = vpop.f32.mrb[0].mxu0
      %759 = vdwg.mxu0
      %v760 = vadd.f32 %v615, %v747
      %v761 = vadd.f32 %v616, %v752
      %v762 = vadd.f32 %v617, %v757
      %v763 = vld [vmem:[%s2] sm:$0x1]
      %v765 = vlaneseq
      %v766 = vshrl.u32 %v765, 7
      %v767 = vsub.s32 0, %v766
      %v768 = vrot.slane %v763, %v767
      %v770 = vadd.f32 %v760, %v768
      %v771 = vadd.f32 %v761, %v768
      %v772 = vadd.f32 %v762, %v768
      %v773 = vmax.f32 %v770, 0.0
      %v774 = vmax.f32 %v771, 0.0
      %v775 = vmax.f32 %v772, 0.0
      %776 = vst [vmem:[%s206] sm:$0xff] %v773
      %777 = vst [vmem:[%s206 + $0x8] sm:$0xff] %v774
      %778 = vst [vmem:[%s206 + $0x10] sm:$0xf] %v775
      %p779 = scmp.lt.s32.totalorder %s18, 1
      %s780 = scalar_select %p779, %s18, 1
      %p781 = scmp.lt.s32.totalorder %s19, 0
      %s782 = scalar_select %p781, %s19, 0
      %s783 = smul.addr %s782, 3
      %s784 = smul.addr %s780, 3
      %s785 = sadd.s32 %s783, %s784
      %s786 = smul.addr %s785, 8
      %s787 = scalar_lea.vmem %s3, %s786
      // Predicated region
      $region33: #{renderer_encoder.3} parent=31 // pred_check
        %p788 = pneg %p116
      $region34: #{renderer_encoder.3} parent=31 // pred_check_branch
        %790 = sbr.rel (%p788) target = $region36
      $region35: #{renderer_encoder.3} parent=31 // pred_region
        _
      $region36: #{renderer_encoder.3} parent=31 // pred_fallthru
        _
    $region32: #{renderer_encoder.3} parent=5 // pred_fallthru
      _
    %p791 = scmp.le.s32.totalorder 2, %s9
    // Predicated region
    $region37: #{renderer_encoder.3} parent=5 // pred_check
      %p792 = pneg %p791
    $region38: #{renderer_encoder.3} parent=5 // pred_check_branch
      %794 = sbr.rel (%p792) target = $region40
    $region39: #{renderer_encoder.3} parent=5 // pred_region
      %s795 = ssub.s32 %s9, 2
      // Predicated region
      $region41: #{renderer_encoder.3} parent=39 // pred_check
        %p796 = pneg %p122
      $region42: #{renderer_encoder.3} parent=39 // pred_check_branch
        %798 = sbr.rel (%p796) target = $region44
      $region43: #{renderer_encoder.3} parent=39 // pred_region
        %p799 = scmp.lt.s32.totalorder %s20, 1
        %s800 = scalar_select %p799, %s20, 1
        %p801 = scmp.lt.s32.totalorder %s21, 0
        %s802 = scalar_select %p801, %s21, 0
        %s803 = smul.addr %s802, 3
        %s804 = smul.addr %s800, 3
        %s805 = sadd.s32 %s803, %s804
        %s806 = smul.addr %s805, 8
        %s807 = scalar_lea.vmem %s3, %s806
      $region44: #{renderer_encoder.3} parent=39 // pred_fallthru
        _
    $region40: #{renderer_encoder.3} parent=5 // pred_fallthru
      _
  $region6: #{renderer_encoder.3} parent=0 // loop_footer
    %s13 = sadd.s32 1, %s9
  $region7: #{renderer_encoder.3} parent=0 // loop_footer_branch
    %8 = sbr.rel target = $region3
  $region8: #{renderer_encoder.3} parent=0 // loop_exit
    _

</llo_original>
